<compile_context>
chip_gen: v6e
topology: v6e:2x2x1
jax: 0.10.0
libtpu: 0.0.40
codegen_flags: <defaults>
</compile_context>

<pallas_src>
import jax
import jax.numpy as jnp
import numpy as np
from jax.experimental import pallas as pl
from jax.experimental.pallas import tpu as pltpu


ORDER = 2  # mixprop propagation order (K)


def _gcn_fused_kernel(x_ref, bmat_ref, bias_ref, out_ref):
    """One pixel tile: out = x @ Bmat + bias (pure MXU + one f32 VPU add).

    x_ref    : (TP, C*V)      VMEM (bf16)  pixels x (channel-major, node-minor)
    bmat_ref : (C*V, Cout*V)  VMEM (bf16)  folded propagation + 1x1-conv operator
    bias_ref : (1, Cout*V)    VMEM (f32)   per-output-channel bias, broadcast over V
    out_ref  : (TP, Cout*V)   VMEM         lane-dense output
    """
    acc = jnp.dot(x_ref[...], bmat_ref[...], preferred_element_type=jnp.float32)
    out_ref[...] = (acc + bias_ref[...]).astype(out_ref.dtype)


def _round_up(x, m):
    return ((x + m - 1) // m) * m


def gcn_forward(x, supports, w, b, *, order=ORDER, max_tile_p=512,
                compute_dtype=jnp.bfloat16):
    """x: (N, C, V, L); supports: (S, V, V); w: (Cout, (S*order+1)*C); b: (Cout,)."""
    N, C, V, L = x.shape
    S = supports.shape[0]
    K = order
    n_branch = S * K + 1
    Cout = w.shape[0]
    assert w.shape[1] == n_branch * C

    # ---- pad nodes to a lane multiple so slices stay lane-aligned -----------
    Vp = _round_up(V, 128)
    if Vp != V:
        x = jnp.pad(x, ((0, 0), (0, 0), (0, Vp - V), (0, 0)))
        supports = jnp.pad(supports, ((0, 0), (0, Vp - V), (0, Vp - V)))

    # ---- fold conv weights into the propagation operator (tiny precompute) ----
    # Branch order matches torch.cat: [identity, s0k1, s0k2, s1k1, ...].
    mats = [jnp.eye(Vp, dtype=jnp.float32)]
    for s in range(S):
        a = supports[s].astype(jnp.float32)
        cur = a
        mats.append(cur)
        for _ in range(K - 1):
            cur = jnp.dot(cur, a, preferred_element_type=jnp.float32)
            mats.append(cur)
    pstack = jnp.stack(mats, axis=0)                                # (n_branch, Vp, Vp)
    w_r = w.astype(jnp.float32).reshape(Cout, n_branch, C)          # w[o, branch*C + c]
    # Bmat[c*Vp + v, o*Vp + u] = sum_branch w[o, branch*C + c] * P_branch[v, u]
    bmat = jnp.einsum("obc,bvu->cvou", w_r, pstack).reshape(C * Vp, Cout * Vp)
    bmat = bmat.astype(compute_dtype)
    bias_row = jnp.broadcast_to(
        b.astype(jnp.float32)[:, None], (Cout, Vp)).reshape(1, Cout * Vp)

    # ---- layout: (P, C*Vp) with P = N*L pixels, channel-major / node-minor ----
    P = N * L
    x2 = jnp.transpose(x, (0, 3, 1, 2)).reshape(P, C * Vp).astype(compute_dtype)

    # Tile the pixel axis (sublane multiple: 16 for bf16, 8 suffices for f32).
    sub = 16 if jnp.dtype(compute_dtype).itemsize < 4 else 8
    tile_p = max_tile_p if P >= max_tile_p else _round_up(P, sub)
    tile_p = _round_up(tile_p, sub)
    P_pad = _round_up(P, tile_p)
    if P_pad != P:
        x2 = jnp.pad(x2, ((0, P_pad - P), (0, 0)))

    grid = (P_pad // tile_p,)
    flops = 2 * P_pad * (C * Vp) * (Cout * Vp)
    bytes_accessed = (x2.size * x2.dtype.itemsize
                      + bmat.size * bmat.dtype.itemsize
                      + bias_row.size * 4
                      + P_pad * Cout * Vp * jnp.dtype(x.dtype).itemsize)

    out2 = pl.pallas_call(
        _gcn_fused_kernel,
        out_shape=jax.ShapeDtypeStruct((P_pad, Cout * Vp), x.dtype),
        grid=grid,
        in_specs=[
            pl.BlockSpec((tile_p, C * Vp), lambda i: (i, 0)),
            pl.BlockSpec((C * Vp, Cout * Vp), lambda i: (0, 0)),  # resident operator
            pl.BlockSpec((1, Cout * Vp), lambda i: (0, 0)),       # resident bias row
        ],
        out_specs=pl.BlockSpec((tile_p, Cout * Vp), lambda i: (i, 0)),
        compiler_params=pltpu.CompilerParams(
            dimension_semantics=("parallel",),
            vmem_limit_bytes=32 * 1024 * 1024,   # conservative for v7x's 64 MiB VMEM
        ),
        cost_estimate=pl.CostEstimate(
            flops=flops, transcendentals=0, bytes_accessed=bytes_accessed),
    )(x2, bmat, bias_row)

    # back to NCHW: (N, Cout, V, L)
    # TODO(synk): for production shapes, have the consumer accept the lane-dense
    # (P, Cout*V) layout directly to avoid this extra HBM transpose pass.
    out = out2[:P].reshape(N, L, Cout, Vp)[..., :V]
    out = jnp.transpose(out, (0, 2, 3, 1))
    # TODO(synk): F.dropout is stochastic only in training; inference == identity.
    return out


def gcn_reference(x, supports, w, b, *, order=ORDER):
    """Pure-JAX reference mirroring the PyTorch forward (eval mode)."""
    out = [x]
    for s in range(supports.shape[0]):
        a = supports[s]
        x1 = jnp.einsum("ncvl,vw->ncwl", x, a)
        out.append(x1)
        for _ in range(2, order + 1):
            x2 = jnp.einsum("ncvl,vw->ncwl", x1, a)
            out.append(x2)
            x1 = x2
    h = jnp.concatenate(out, axis=1)
    return jnp.einsum("oc,ncvl->novl", w, h) + b[None, :, None, None]


if __name__ == "__main__":
    key = jax.random.PRNGKey(0)
    N, C, V, L = 2, 4, 128, 8          # batch, c_in, num_nodes, seq_len
    S, Cout = 3, 8                     # support_len, c_out
    Ctot = (S * ORDER + 1) * C         # (order*support_len + 1) * c_in = 28

    kx, ka, kw, kb = jax.random.split(key, 4)
    x = jax.random.normal(kx, (N, C, V, L), dtype=jnp.float32)
    supports = jax.nn.softmax(
        jax.random.normal(ka, (S, V, V), dtype=jnp.float32), axis=-1)
    w = jax.random.normal(kw, (Cout, Ctot), dtype=jnp.float32) * 0.1  # Conv2d 1x1 weight
    b = jax.random.normal(kb, (Cout,), dtype=jnp.float32) * 0.1       # Conv2d bias

    out = jax.block_until_ready(jax.jit(gcn_forward)(x, supports, w, b))

    ref = gcn_reference(x, supports, w, b)
    # bf16 matmul operands with f32 accumulation -> loosen tolerance accordingly.
    np.testing.assert_allclose(np.asarray(out), np.asarray(ref),
                               rtol=2e-2, atol=2e-2)
    print("KERNEL_OK")
</pallas_src>

<mosaic_0001>
module attributes {stable_mosaic.version = 11 : i64} {
  func.func @_gcn_fused_kernel(%arg0: i32, %arg1: memref<16x512xbf16, #tpu.memory_space<vmem>>, %arg2: memref<512x1024xbf16, #tpu.memory_space<vmem>>, %arg3: memref<1x1024xf32, #tpu.memory_space<vmem>>, %arg4: memref<16x1024xf32, #tpu.memory_space<vmem>>) attributes {dimension_semantics = [#tpu.dimension_semantics<parallel>], iteration_bounds = array<i64: 1>, scalar_prefetch = 0 : i64, scratch_operands = 0 : i64, tpu.core_type = #tpu.core_type<tc>, window_params = [{transform_indices = @transform_0, window_bounds = array<i64: 16, 512>}, {pipeline_mode = #tpu.pipeline_mode<synchronous>, transform_indices = @transform_1, window_bounds = array<i64: 512, 1024>}, {pipeline_mode = #tpu.pipeline_mode<synchronous>, transform_indices = @transform_2, window_bounds = array<i64: 1, 1024>}, {transform_indices = @transform_3, window_bounds = array<i64: 16, 1024>}]} {
    %c0 = arith.constant 0 : index
    %c0_0 = arith.constant 0 : index
    %0 = vector.load %arg1[%c0, %c0_0] : memref<16x512xbf16, #tpu.memory_space<vmem>>, vector<16x512xbf16>
    %c0_1 = arith.constant 0 : index
    %c0_2 = arith.constant 0 : index
    %1 = vector.load %arg2[%c0_1, %c0_2] : memref<512x1024xbf16, #tpu.memory_space<vmem>>, vector<512x1024xbf16>
    %cst = arith.constant dense<0.000000e+00> : vector<16x1024xf32>
    %2 = tpu.matmul %0, %1, %cst {dimension_numbers = #tpu.dot_dimension_numbers<[1], [0], [0], [1], [0, 0, 1, 1], [], []>} : vector<16x512xbf16>, vector<512x1024xbf16>, vector<16x1024xf32> -> vector<16x1024xf32>
    %c0_3 = arith.constant 0 : index
    %c0_4 = arith.constant 0 : index
    %3 = vector.load %arg3[%c0_3, %c0_4] : memref<1x1024xf32, #tpu.memory_space<vmem>>, vector<1x1024xf32>
    %4 = vector.broadcast %3 : vector<1x1024xf32> to vector<16x1024xf32>
    %5 = arith.addf %2, %4 : vector<16x1024xf32>
    %c0_5 = arith.constant 0 : index
    %c0_6 = arith.constant 0 : index
    %6 = vector.load %arg4[%c0_5, %c0_6] : memref<16x1024xf32, #tpu.memory_space<vmem>>, vector<16x1024xf32>
    tpu.vector_store %arg4[%c0_5, %c0_6], %5 {strides = array<i32>} : memref<16x1024xf32, #tpu.memory_space<vmem>>, vector<16x1024xf32>,
    return
  }
  func.func @transform_0(%arg0: i32) -> (i32, i32) {
    %c0_i32 = arith.constant 0 : i32
    %c0_i32_0 = arith.constant 0 : i32
    return %arg0, %c0_i32 : i32, i32
  }
  func.func @transform_1(%arg0: i32) -> (i32, i32) {
    %c0_i32 = arith.constant 0 : i32
    %c0_i32_0 = arith.constant 0 : i32
    %c0_i32_1 = arith.constant 0 : i32
    return %c0_i32, %c0_i32_0 : i32, i32
  }
  func.func @transform_2(%arg0: i32) -> (i32, i32) {
    %c0_i32 = arith.constant 0 : i32
    %c0_i32_0 = arith.constant 0 : i32
    %c0_i32_1 = arith.constant 0 : i32
    return %c0_i32, %c0_i32_0 : i32, i32
  }
  func.func @transform_3(%arg0: i32) -> (i32, i32) {
    %c0_i32 = arith.constant 0 : i32
    %c0_i32_0 = arith.constant 0 : i32
    return %arg0, %c0_i32 : i32, i32
  }
}

</mosaic_0001>

<llo_original>
// kernel: gcn_forward.1
$region0: #{gcn_forward.1}
  #allocation0 [shape = 'u32[]', space=smem, size = 0x4, offset = 0x4, fixed_abs, tag = 'smem constant byte address 0x4 - core index']
  #allocation1 [shape = 'u32[144,128]{1,0:T(1,128)}', space=vmem, size = 0x12000, scoped, tag = 'internal scratch']
  %s0 = inlined_call_operand.vmem [shape: bf16[16,512], index: 0, kind: input, shape index: {}]
  %s1 = inlined_call_operand.vmem [shape: bf16[512,1024], index: 1, kind: input, shape index: {}]
  %s2 = inlined_call_operand.vmem [shape: f32[1,1024], index: 2, kind: input, shape index: {}]
  %s3 = inlined_call_operand.hbm [shape: f32[16,1024], index: 3, kind: output, shape index: {}]
  %s4 = sld [smem:[#allocation0]]
  $region22: #{gcn_forward.1} parent=0
    _
  %s6 = ssub.s32 1, %s4
  %s7 = scalar_select 0, %s6, %s4
  $region1: #{gcn_forward.1} parent=0
    #allocation2 [shape = 'u8[65536]{0}', space=vmem, size = 0x10000, scoped, tag = 'output window, operand 0, single buffered']
    #allocation3 [shape = 's32[1]{0}', space=sflag, size = 0x4, scoped, tag = 'scoped memory for gcn_forward.1']
    %8 = vsyncpa [#allocation3], 0
    // Predicated region
    $region2: #{gcn_forward.1} parent=1 // pred_check
      _
    $region3: #{gcn_forward.1} parent=1 // pred_check_branch
      %10 = sbr.rel (0) target = $region5
    $region4: #{gcn_forward.1} parent=1 // pred_region
      _
    $region5: #{gcn_forward.1} parent=1 // pred_fallthru
      _
    // Predicated region
    $region6: #{gcn_forward.1} parent=1 // pred_check
      _
    $region7: #{gcn_forward.1} parent=1 // pred_check_branch
      %12 = sbr.rel (0) target = $region9
    $region8: #{gcn_forward.1} parent=1 // pred_region
      _
    $region9: #{gcn_forward.1} parent=1 // pred_fallthru
      _
    // Predicated region
    $region10: #{gcn_forward.1} parent=1 // pred_check
      _
    $region11: #{gcn_forward.1} parent=1 // pred_check_branch
      %14 = sbr.rel (0) target = $region13
    $region12: #{gcn_forward.1} parent=1 // pred_region
      _
    $region13: #{gcn_forward.1} parent=1 // pred_fallthru
      _
    %v15 = vld [vmem:[%s0] sm:$0xff]
    %v16 = vld [vmem:[%s0 + $0x8] sm:$0xff]
    %v17 = vld [vmem:[%s0 + $0x10] sm:$0xff]
    %v18 = vld [vmem:[%s0 + $0x18] sm:$0xff]
    %v19 = vld [vmem:[%s1] sm:$0xff]
    %v20 = vld [vmem:[%s1 + $0x8] sm:$0xff]
    %v21 = vld [vmem:[%s1 + $0x10] sm:$0xff]
    %v22 = vld [vmem:[%s1 + $0x18] sm:$0xff]
    %v23 = vld [vmem:[%s1 + $0x20] sm:$0xff]
    %v24 = vld [vmem:[%s1 + $0x28] sm:$0xff]
    %v25 = vld [vmem:[%s1 + $0x30] sm:$0xff]
    %v26 = vld [vmem:[%s1 + $0x38] sm:$0xff]
    %v27 = vld [vmem:[%s1 + $0x40] sm:$0xff]
    %v28 = vld [vmem:[%s1 + $0x48] sm:$0xff]
    %v29 = vld [vmem:[%s1 + $0x50] sm:$0xff]
    %v30 = vld [vmem:[%s1 + $0x58] sm:$0xff]
    %v31 = vld [vmem:[%s1 + $0x60] sm:$0xff]
    %v32 = vld [vmem:[%s1 + $0x68] sm:$0xff]
    %v33 = vld [vmem:[%s1 + $0x70] sm:$0xff]
    %v34 = vld [vmem:[%s1 + $0x78] sm:$0xff]
    %v35 = vld [vmem:[%s1 + $0x80] sm:$0xff]
    %v36 = vld [vmem:[%s1 + $0x88] sm:$0xff]
    %v37 = vld [vmem:[%s1 + $0x90] sm:$0xff]
    %v38 = vld [vmem:[%s1 + $0x98] sm:$0xff]
    %v39 = vld [vmem:[%s1 + $0xa0] sm:$0xff]
    %v40 = vld [vmem:[%s1 + $0xa8] sm:$0xff]
    %v41 = vld [vmem:[%s1 + $0xb0] sm:$0xff]
    %v42 = vld [vmem:[%s1 + $0xb8] sm:$0xff]
    %v43 = vld [vmem:[%s1 + $0xc0] sm:$0xff]
    %v44 = vld [vmem:[%s1 + $0xc8] sm:$0xff]
    %v45 = vld [vmem:[%s1 + $0xd0] sm:$0xff]
    %v46 = vld [vmem:[%s1 + $0xd8] sm:$0xff]
    %v47 = vld [vmem:[%s1 + $0xe0] sm:$0xff]
    %v48 = vld [vmem:[%s1 + $0xe8] sm:$0xff]
    %v49 = vld [vmem:[%s1 + $0xf0] sm:$0xff]
    %v50 = vld [vmem:[%s1 + $0xf8] sm:$0xff]
    %v51 = vld [vmem:[%s1 + $0x100] sm:$0xff]
    %v52 = vld [vmem:[%s1 + $0x108] sm:$0xff]
    %v53 = vld [vmem:[%s1 + $0x110] sm:$0xff]
    %v54 = vld [vmem:[%s1 + $0x118] sm:$0xff]
    %v55 = vld [vmem:[%s1 + $0x120] sm:$0xff]
    %v56 = vld [vmem:[%s1 + $0x128] sm:$0xff]
    %v57 = vld [vmem:[%s1 + $0x130] sm:$0xff]
    %v58 = vld [vmem:[%s1 + $0x138] sm:$0xff]
    %v59 = vld [vmem:[%s1 + $0x140] sm:$0xff]
    %v60 = vld [vmem:[%s1 + $0x148] sm:$0xff]
    %v61 = vld [vmem:[%s1 + $0x150] sm:$0xff]
    %v62 = vld [vmem:[%s1 + $0x158] sm:$0xff]
    %v63 = vld [vmem:[%s1 + $0x160] sm:$0xff]
    %v64 = vld [vmem:[%s1 + $0x168] sm:$0xff]
    %v65 = vld [vmem:[%s1 + $0x170] sm:$0xff]
    %v66 = vld [vmem:[%s1 + $0x178] sm:$0xff]
    %v67 = vld [vmem:[%s1 + $0x180] sm:$0xff]
    %v68 = vld [vmem:[%s1 + $0x188] sm:$0xff]
    %v69 = vld [vmem:[%s1 + $0x190] sm:$0xff]
    %v70 = vld [vmem:[%s1 + $0x198] sm:$0xff]
    %v71 = vld [vmem:[%s1 + $0x1a0] sm:$0xff]
    %v72 = vld [vmem:[%s1 + $0x1a8] sm:$0xff]
    %v73 = vld [vmem:[%s1 + $0x1b0] sm:$0xff]
    %v74 = vld [vmem:[%s1 + $0x1b8] sm:$0xff]
    %v75 = vld [vmem:[%s1 + $0x1c0] sm:$0xff]
    %v76 = vld [vmem:[%s1 + $0x1c8] sm:$0xff]
    %v77 = vld [vmem:[%s1 + $0x1d0] sm:$0xff]
    %v78 = vld [vmem:[%s1 + $0x1d8] sm:$0xff]
    %v79 = vld [vmem:[%s1 + $0x1e0] sm:$0xff]
    %v80 = vld [vmem:[%s1 + $0x1e8] sm:$0xff]
    %v81 = vld [vmem:[%s1 + $0x1f0] sm:$0xff]
    %v82 = vld [vmem:[%s1 + $0x1f8] sm:$0xff]
    %v83 = vld [vmem:[%s1 + $0x200] sm:$0xff]
    %v84 = vld [vmem:[%s1 + $0x208] sm:$0xff]
    %v85 = vld [vmem:[%s1 + $0x210] sm:$0xff]
    %v86 = vld [vmem:[%s1 + $0x218] sm:$0xff]
    %v87 = vld [vmem:[%s1 + $0x220] sm:$0xff]
    %v88 = vld [vmem:[%s1 + $0x228] sm:$0xff]
    %v89 = vld [vmem:[%s1 + $0x230] sm:$0xff]
    %v90 = vld [vmem:[%s1 + $0x238] sm:$0xff]
    %v91 = vld [vmem:[%s1 + $0x240] sm:$0xff]
    %v92 = vld [vmem:[%s1 + $0x248] sm:$0xff]
    %v93 = vld [vmem:[%s1 + $0x250] sm:$0xff]
    %v94 = vld [vmem:[%s1 + $0x258] sm:$0xff]
    %v95 = vld [vmem:[%s1 + $0x260] sm:$0xff]
    %v96 = vld [vmem:[%s1 + $0x268] sm:$0xff]
    %v97 = vld [vmem:[%s1 + $0x270] sm:$0xff]
    %v98 = vld [vmem:[%s1 + $0x278] sm:$0xff]
    %v99 = vld [vmem:[%s1 + $0x280] sm:$0xff]
    %v100 = vld [vmem:[%s1 + $0x288] sm:$0xff]
    %v101 = vld [vmem:[%s1 + $0x290] sm:$0xff]
    %v102 = vld [vmem:[%s1 + $0x298] sm:$0xff]
    %v103 = vld [vmem:[%s1 + $0x2a0] sm:$0xff]
    %v104 = vld [vmem:[%s1 + $0x2a8] sm:$0xff]
    %v105 = vld [vmem:[%s1 + $0x2b0] sm:$0xff]
    %v106 = vld [vmem:[%s1 + $0x2b8] sm:$0xff]
    %v107 = vld [vmem:[%s1 + $0x2c0] sm:$0xff]
    %v108 = vld [vmem:[%s1 + $0x2c8] sm:$0xff]
    %v109 = vld [vmem:[%s1 + $0x2d0] sm:$0xff]
    %v110 = vld [vmem:[%s1 + $0x2d8] sm:$0xff]
    %v111 = vld [vmem:[%s1 + $0x2e0] sm:$0xff]
    %v112 = vld [vmem:[%s1 + $0x2e8] sm:$0xff]
    %v113 = vld [vmem:[%s1 + $0x2f0] sm:$0xff]
    %v114 = vld [vmem:[%s1 + $0x2f8] sm:$0xff]
    %v115 = vld [vmem:[%s1 + $0x300] sm:$0xff]
    %v116 = vld [vmem:[%s1 + $0x308] sm:$0xff]
    %v117 = vld [vmem:[%s1 + $0x310] sm:$0xff]
    %v118 = vld [vmem:[%s1 + $0x318] sm:$0xff]
    %v119 = vld [vmem:[%s1 + $0x320] sm:$0xff]
    %v120 = vld [vmem:[%s1 + $0x328] sm:$0xff]
    %v121 = vld [vmem:[%s1 + $0x330] sm:$0xff]
    %v122 = vld [vmem:[%s1 + $0x338] sm:$0xff]
    %v123 = vld [vmem:[%s1 + $0x340] sm:$0xff]
    %v124 = vld [vmem:[%s1 + $0x348] sm:$0xff]
    %v125 = vld [vmem:[%s1 + $0x350] sm:$0xff]
    %v126 = vld [vmem:[%s1 + $0x358] sm:$0xff]
    %v127 = vld [vmem:[%s1 + $0x360] sm:$0xff]
    %v128 = vld [vmem:[%s1 + $0x368] sm:$0xff]
    %v129 = vld [vmem:[%s1 + $0x370] sm:$0xff]
    %v130 = vld [vmem:[%s1 + $0x378] sm:$0xff]
    %v131 = vld [vmem:[%s1 + $0x380] sm:$0xff]
    %v132 = vld [vmem:[%s1 + $0x388] sm:$0xff]
    %v133 = vld [vmem:[%s1 + $0x390] sm:$0xff]
    %v134 = vld [vmem:[%s1 + $0x398] sm:$0xff]
    %v135 = vld [vmem:[%s1 + $0x3a0] sm:$0xff]
    %v136 = vld [vmem:[%s1 + $0x3a8] sm:$0xff]
    %v137 = vld [vmem:[%s1 + $0x3b0] sm:$0xff]
    %v138 = vld [vmem:[%s1 + $0x3b8] sm:$0xff]
    %v139 = vld [vmem:[%s1 + $0x3c0] sm:$0xff]
    %v140 = vld [vmem:[%s1 + $0x3c8] sm:$0xff]
    %v141 = vld [vmem:[%s1 + $0x3d0] sm:$0xff]
    %v142 = vld [vmem:[%s1 + $0x3d8] sm:$0xff]
    %v143 = vld [vmem:[%s1 + $0x3e0] sm:$0xff]
    %v144 = vld [vmem:[%s1 + $0x3e8] sm:$0xff]
    %v145 = vld [vmem:[%s1 + $0x3f0] sm:$0xff]
    %v146 = vld [vmem:[%s1 + $0x3f8] sm:$0xff]
    %v147 = vld [vmem:[%s1 + $0x400] sm:$0xff]
    %v148 = vld [vmem:[%s1 + $0x408] sm:$0xff]
    %v149 = vld [vmem:[%s1 + $0x410] sm:$0xff]
    %v150 = vld [vmem:[%s1 + $0x418] sm:$0xff]
    %v151 = vld [vmem:[%s1 + $0x420] sm:$0xff]
    %v152 = vld [vmem:[%s1 + $0x428] sm:$0xff]
    %v153 = vld [vmem:[%s1 + $0x430] sm:$0xff]
    %v154 = vld [vmem:[%s1 + $0x438] sm:$0xff]
    %v155 = vld [vmem:[%s1 + $0x440] sm:$0xff]
    %v156 = vld [vmem:[%s1 + $0x448] sm:$0xff]
    %v157 = vld [vmem:[%s1 + $0x450] sm:$0xff]
    %v158 = vld [vmem:[%s1 + $0x458] sm:$0xff]
    %v159 = vld [vmem:[%s1 + $0x460] sm:$0xff]
    %v160 = vld [vmem:[%s1 + $0x468] sm:$0xff]
    %v161 = vld [vmem:[%s1 + $0x470] sm:$0xff]
    %v162 = vld [vmem:[%s1 + $0x478] sm:$0xff]
    %v163 = vld [vmem:[%s1 + $0x480] sm:$0xff]
    %v164 = vld [vmem:[%s1 + $0x488] sm:$0xff]
    %v165 = vld [vmem:[%s1 + $0x490] sm:$0xff]
    %v166 = vld [vmem:[%s1 + $0x498] sm:$0xff]
    %v167 = vld [vmem:[%s1 + $0x4a0] sm:$0xff]
    %v168 = vld [vmem:[%s1 + $0x4a8] sm:$0xff]
    %v169 = vld [vmem:[%s1 + $0x4b0] sm:$0xff]
    %v170 = vld [vmem:[%s1 + $0x4b8] sm:$0xff]
    %v171 = vld [vmem:[%s1 + $0x4c0] sm:$0xff]
    %v172 = vld [vmem:[%s1 + $0x4c8] sm:$0xff]
    %v173 = vld [vmem:[%s1 + $0x4d0] sm:$0xff]
    %v174 = vld [vmem:[%s1 + $0x4d8] sm:$0xff]
    %v175 = vld [vmem:[%s1 + $0x4e0] sm:$0xff]
    %v176 = vld [vmem:[%s1 + $0x4e8] sm:$0xff]
    %v177 = vld [vmem:[%s1 + $0x4f0] sm:$0xff]
    %v178 = vld [vmem:[%s1 + $0x4f8] sm:$0xff]
    %v179 = vld [vmem:[%s1 + $0x500] sm:$0xff]
    %v180 = vld [vmem:[%s1 + $0x508] sm:$0xff]
    %v181 = vld [vmem:[%s1 + $0x510] sm:$0xff]
    %v182 = vld [vmem:[%s1 + $0x518] sm:$0xff]
    %v183 = vld [vmem:[%s1 + $0x520] sm:$0xff]
    %v184 = vld [vmem:[%s1 + $0x528] sm:$0xff]
    %v185 = vld [vmem:[%s1 + $0x530] sm:$0xff]
    %v186 = vld [vmem:[%s1 + $0x538] sm:$0xff]
    %v187 = vld [vmem:[%s1 + $0x540] sm:$0xff]
    %v188 = vld [vmem:[%s1 + $0x548] sm:$0xff]
    %v189 = vld [vmem:[%s1 + $0x550] sm:$0xff]
    %v190 = vld [vmem:[%s1 + $0x558] sm:$0xff]
    %v191 = vld [vmem:[%s1 + $0x560] sm:$0xff]
    %v192 = vld [vmem:[%s1 + $0x568] sm:$0xff]
    %v193 = vld [vmem:[%s1 + $0x570] sm:$0xff]
    %v194 = vld [vmem:[%s1 + $0x578] sm:$0xff]
    %v195 = vld [vmem:[%s1 + $0x580] sm:$0xff]
    %v196 = vld [vmem:[%s1 + $0x588] sm:$0xff]
    %v197 = vld [vmem:[%s1 + $0x590] sm:$0xff]
    %v198 = vld [vmem:[%s1 + $0x598] sm:$0xff]
    %v199 = vld [vmem:[%s1 + $0x5a0] sm:$0xff]
    %v200 = vld [vmem:[%s1 + $0x5a8] sm:$0xff]
    %v201 = vld [vmem:[%s1 + $0x5b0] sm:$0xff]
    %v202 = vld [vmem:[%s1 + $0x5b8] sm:$0xff]
    %v203 = vld [vmem:[%s1 + $0x5c0] sm:$0xff]
    %v204 = vld [vmem:[%s1 + $0x5c8] sm:$0xff]
    %v205 = vld [vmem:[%s1 + $0x5d0] sm:$0xff]
    %v206 = vld [vmem:[%s1 + $0x5d8] sm:$0xff]
    %v207 = vld [vmem:[%s1 + $0x5e0] sm:$0xff]
    %v208 = vld [vmem:[%s1 + $0x5e8] sm:$0xff]
    %v209 = vld [vmem:[%s1 + $0x5f0] sm:$0xff]
    %v210 = vld [vmem:[%s1 + $0x5f8] sm:$0xff]
    %v211 = vld [vmem:[%s1 + $0x600] sm:$0xff]
    %v212 = vld [vmem:[%s1 + $0x608] sm:$0xff]
    %v213 = vld [vmem:[%s1 + $0x610] sm:$0xff]
    %v214 = vld [vmem:[%s1 + $0x618] sm:$0xff]
    %v215 = vld [vmem:[%s1 + $0x620] sm:$0xff]
    %v216 = vld [vmem:[%s1 + $0x628] sm:$0xff]
    %v217 = vld [vmem:[%s1 + $0x630] sm:$0xff]
    %v218 = vld [vmem:[%s1 + $0x638] sm:$0xff]
    %v219 = vld [vmem:[%s1 + $0x640] sm:$0xff]
    %v220 = vld [vmem:[%s1 + $0x648] sm:$0xff]
    %v221 = vld [vmem:[%s1 + $0x650] sm:$0xff]
    %v222 = vld [vmem:[%s1 + $0x658] sm:$0xff]
    %v223 = vld [vmem:[%s1 + $0x660] sm:$0xff]
    %v224 = vld [vmem:[%s1 + $0x668] sm:$0xff]
    %v225 = vld [vmem:[%s1 + $0x670] sm:$0xff]
    %v226 = vld [vmem:[%s1 + $0x678] sm:$0xff]
    %v227 = vld [vmem:[%s1 + $0x680] sm:$0xff]
    %v228 = vld [vmem:[%s1 + $0x688] sm:$0xff]
    %v229 = vld [vmem:[%s1 + $0x690] sm:$0xff]
    %v230 = vld [vmem:[%s1 + $0x698] sm:$0xff]
    %v231 = vld [vmem:[%s1 + $0x6a0] sm:$0xff]
    %v232 = vld [vmem:[%s1 + $0x6a8] sm:$0xff]
    %v233 = vld [vmem:[%s1 + $0x6b0] sm:$0xff]
    %v234 = vld [vmem:[%s1 + $0x6b8] sm:$0xff]
    %v235 = vld [vmem:[%s1 + $0x6c0] sm:$0xff]
    %v236 = vld [vmem:[%s1 + $0x6c8] sm:$0xff]
    %v237 = vld [vmem:[%s1 + $0x6d0] sm:$0xff]
    %v238 = vld [vmem:[%s1 + $0x6d8] sm:$0xff]
    %v239 = vld [vmem:[%s1 + $0x6e0] sm:$0xff]
    %v240 = vld [vmem:[%s1 + $0x6e8] sm:$0xff]
    %v241 = vld [vmem:[%s1 + $0x6f0] sm:$0xff]
    %v242 = vld [vmem:[%s1 + $0x6f8] sm:$0xff]
    %v243 = vld [vmem:[%s1 + $0x700] sm:$0xff]
    %v244 = vld [vmem:[%s1 + $0x708] sm:$0xff]
    %v245 = vld [vmem:[%s1 + $0x710] sm:$0xff]
    %v246 = vld [vmem:[%s1 + $0x718] sm:$0xff]
    %v247 = vld [vmem:[%s1 + $0x720] sm:$0xff]
    %v248 = vld [vmem:[%s1 + $0x728] sm:$0xff]
    %v249 = vld [vmem:[%s1 + $0x730] sm:$0xff]
    %v250 = vld [vmem:[%s1 + $0x738] sm:$0xff]
    %v251 = vld [vmem:[%s1 + $0x740] sm:$0xff]
    %v252 = vld [vmem:[%s1 + $0x748] sm:$0xff]
    %v253 = vld [vmem:[%s1 + $0x750] sm:$0xff]
    %v254 = vld [vmem:[%s1 + $0x758] sm:$0xff]
    %v255 = vld [vmem:[%s1 + $0x760] sm:$0xff]
    %v256 = vld [vmem:[%s1 + $0x768] sm:$0xff]
    %v257 = vld [vmem:[%s1 + $0x770] sm:$0xff]
    %v258 = vld [vmem:[%s1 + $0x778] sm:$0xff]
    %v259 = vld [vmem:[%s1 + $0x780] sm:$0xff]
    %v260 = vld [vmem:[%s1 + $0x788] sm:$0xff]
    %v261 = vld [vmem:[%s1 + $0x790] sm:$0xff]
    %v262 = vld [vmem:[%s1 + $0x798] sm:$0xff]
    %v263 = vld [vmem:[%s1 + $0x7a0] sm:$0xff]
    %v264 = vld [vmem:[%s1 + $0x7a8] sm:$0xff]
    %v265 = vld [vmem:[%s1 + $0x7b0] sm:$0xff]
    %v266 = vld [vmem:[%s1 + $0x7b8] sm:$0xff]
    %v267 = vld [vmem:[%s1 + $0x7c0] sm:$0xff]
    %v268 = vld [vmem:[%s1 + $0x7c8] sm:$0xff]
    %v269 = vld [vmem:[%s1 + $0x7d0] sm:$0xff]
    %v270 = vld [vmem:[%s1 + $0x7d8] sm:$0xff]
    %v271 = vld [vmem:[%s1 + $0x7e0] sm:$0xff]
    %v272 = vld [vmem:[%s1 + $0x7e8] sm:$0xff]
    %v273 = vld [vmem:[%s1 + $0x7f0] sm:$0xff]
    %v274 = vld [vmem:[%s1 + $0x7f8] sm:$0xff]
    %v275 = vld [vmem:[%s2] sm:$0xff]
    %v277 = vlaneseq
    %v278 = vshrl.u32 %v277, 7
    %v279 = vsub.s32 0, %v278
    %v280 = vrot.slane %v275, %v279
    %v281 = vlaneseq
    %v282 = vshrl.u32 %v281, 7
    %v283 = vsub.s32 1, %v282
    %v284 = vrot.slane %v275, %v283
    %v285 = vlaneseq
    %v286 = vshrl.u32 %v285, 7
    %v287 = vsub.s32 2, %v286
    %v288 = vrot.slane %v275, %v287
    %v289 = vlaneseq
    %v290 = vshrl.u32 %v289, 7
    %v291 = vsub.s32 3, %v290
    %v292 = vrot.slane %v275, %v291
    %v293 = vlaneseq
    %v294 = vshrl.u32 %v293, 7
    %v295 = vsub.s32 4, %v294
    %v296 = vrot.slane %v275, %v295
    %v297 = vlaneseq
    %v298 = vshrl.u32 %v297, 7
    %v299 = vsub.s32 5, %v298
    %v300 = vrot.slane %v275, %v299
    %v301 = vlaneseq
    %v302 = vshrl.u32 %v301, 7
    %v303 = vsub.s32 6, %v302
    %v304 = vrot.slane %v275, %v303
    %v305 = vlaneseq
    %v306 = vshrl.u32 %v305, 7
    %v307 = vsub.s32 7, %v306
    %v308 = vrot.slane %v275, %v307
    %v321 = vunpack.c.l.b16 %v15
    %v322 = vunpack.c.h.b16 %v15
    %v323 = vunpack.c.l.b16 %v16
    %v324 = vunpack.c.h.b16 %v16
    %v325 = vunpack.c.l.b16 %v17
    %v326 = vunpack.c.h.b16 %v17
    %v327 = vunpack.c.l.b16 %v18
    %v328 = vunpack.c.h.b16 %v18
    %v329 = vpack.c.b16 %v325, %v321
    %v330 = vpack.c.b16 %v326, %v322
    %v331 = vpack.c.b16 %v327, %v323
    %v332 = vpack.c.b16 %v328, %v324
    %v593 = vunpack.c.l.b16 %v19
    %v594 = vunpack.c.h.b16 %v19
    %v595 = vunpack.c.l.b16 %v20
    %v596 = vunpack.c.h.b16 %v20
    %v597 = vunpack.c.l.b16 %v21
    %v598 = vunpack.c.h.b16 %v21
    %v599 = vunpack.c.l.b16 %v22
    %v600 = vunpack.c.h.b16 %v22
    %v601 = vunpack.c.l.b16 %v23
    %v602 = vunpack.c.h.b16 %v23
    %v603 = vunpack.c.l.b16 %v24
    %v604 = vunpack.c.h.b16 %v24
    %v605 = vunpack.c.l.b16 %v25
    %v606 = vunpack.c.h.b16 %v25
    %v607 = vunpack.c.l.b16 %v26
    %v608 = vunpack.c.h.b16 %v26
    %v609 = vunpack.c.l.b16 %v27
    %v610 = vunpack.c.h.b16 %v27
    %v611 = vunpack.c.l.b16 %v28
    %v612 = vunpack.c.h.b16 %v28
    %v613 = vunpack.c.l.b16 %v29
    %v614 = vunpack.c.h.b16 %v29
    %v615 = vunpack.c.l.b16 %v30
    %v616 = vunpack.c.h.b16 %v30
    %v617 = vunpack.c.l.b16 %v31
    %v618 = vunpack.c.h.b16 %v31
    %v619 = vunpack.c.l.b16 %v32
    %v620 = vunpack.c.h.b16 %v32
    %v621 = vunpack.c.l.b16 %v33
    %v622 = vunpack.c.h.b16 %v33
    %v623 = vunpack.c.l.b16 %v34
    %v624 = vunpack.c.h.b16 %v34
    %v625 = vunpack.c.l.b16 %v35
    %v626 = vunpack.c.h.b16 %v35
    %v627 = vunpack.c.l.b16 %v36
    %v628 = vunpack.c.h.b16 %v36
    %v629 = vunpack.c.l.b16 %v37
    %v630 = vunpack.c.h.b16 %v37
    %v631 = vunpack.c.l.b16 %v38
    %v632 = vunpack.c.h.b16 %v38
    %v633 = vunpack.c.l.b16 %v39
    %v634 = vunpack.c.h.b16 %v39
    %v635 = vunpack.c.l.b16 %v40
    %v636 = vunpack.c.h.b16 %v40
    %v637 = vunpack.c.l.b16 %v41
    %v638 = vunpack.c.h.b16 %v41
    %v639 = vunpack.c.l.b16 %v42
    %v640 = vunpack.c.h.b16 %v42
    %v641 = vunpack.c.l.b16 %v43
    %v642 = vunpack.c.h.b16 %v43
    %v643 = vunpack.c.l.b16 %v44
    %v644 = vunpack.c.h.b16 %v44
    %v645 = vunpack.c.l.b16 %v45
    %v646 = vunpack.c.h.b16 %v45
    %v647 = vunpack.c.l.b16 %v46
    %v648 = vunpack.c.h.b16 %v46
    %v649 = vunpack.c.l.b16 %v47
    %v650 = vunpack.c.h.b16 %v47
    %v651 = vunpack.c.l.b16 %v48
    %v652 = vunpack.c.h.b16 %v48
    %v653 = vunpack.c.l.b16 %v49
    %v654 = vunpack.c.h.b16 %v49
    %v655 = vunpack.c.l.b16 %v50
    %v656 = vunpack.c.h.b16 %v50
    %v657 = vunpack.c.l.b16 %v51
    %v658 = vunpack.c.h.b16 %v51
    %v659 = vunpack.c.l.b16 %v52
    %v660 = vunpack.c.h.b16 %v52
    %v661 = vunpack.c.l.b16 %v53
    %v662 = vunpack.c.h.b16 %v53
    %v663 = vunpack.c.l.b16 %v54
    %v664 = vunpack.c.h.b16 %v54
    %v665 = vunpack.c.l.b16 %v55
    %v666 = vunpack.c.h.b16 %v55
    %v667 = vunpack.c.l.b16 %v56
    %v668 = vunpack.c.h.b16 %v56
    %v669 = vunpack.c.l.b16 %v57
    %v670 = vunpack.c.h.b16 %v57
    %v671 = vunpack.c.l.b16 %v58
    %v672 = vunpack.c.h.b16 %v58
    %v673 = vunpack.c.l.b16 %v59
    %v674 = vunpack.c.h.b16 %v59
    %v675 = vunpack.c.l.b16 %v60
    %v676 = vunpack.c.h.b16 %v60
    %v677 = vunpack.c.l.b16 %v61
    %v678 = vunpack.c.h.b16 %v61
    %v679 = vunpack.c.l.b16 %v62
    %v680 = vunpack.c.h.b16 %v62
    %v681 = vunpack.c.l.b16 %v63
    %v682 = vunpack.c.h.b16 %v63
    %v683 = vunpack.c.l.b16 %v64
    %v684 = vunpack.c.h.b16 %v64
    %v685 = vunpack.c.l.b16 %v65
    %v686 = vunpack.c.h.b16 %v65
    %v687 = vunpack.c.l.b16 %v66
    %v688 = vunpack.c.h.b16 %v66
    %v689 = vunpack.c.l.b16 %v67
    %v690 = vunpack.c.h.b16 %v67
    %v691 = vunpack.c.l.b16 %v68
    %v692 = vunpack.c.h.b16 %v68
    %v693 = vunpack.c.l.b16 %v69
    %v694 = vunpack.c.h.b16 %v69
    %v695 = vunpack.c.l.b16 %v70
    %v696 = vunpack.c.h.b16 %v70
    %v697 = vunpack.c.l.b16 %v71
    %v698 = vunpack.c.h.b16 %v71
    %v699 = vunpack.c.l.b16 %v72
    %v700 = vunpack.c.h.b16 %v72
    %v701 = vunpack.c.l.b16 %v73
    %v702 = vunpack.c.h.b16 %v73
    %v703 = vunpack.c.l.b16 %v74
    %v704 = vunpack.c.h.b16 %v74
    %v705 = vunpack.c.l.b16 %v75
    %v706 = vunpack.c.h.b16 %v75
    %v707 = vunpack.c.l.b16 %v76
    %v708 = vunpack.c.h.b16 %v76
    %v709 = vunpack.c.l.b16 %v77
    %v710 = vunpack.c.h.b16 %v77
    %v711 = vunpack.c.l.b16 %v78
    %v712 = vunpack.c.h.b16 %v78
    %v713 = vunpack.c.l.b16 %v79
    %v714 = vunpack.c.h.b16 %v79
    %v715 = vunpack.c.l.b16 %v80
    %v716 = vunpack.c.h.b16 %v80
    %v717 = vunpack.c.l.b16 %v81
    %v718 = vunpack.c.h.b16 %v81
    %v719 = vunpack.c.l.b16 %v82
    %v720 = vunpack.c.h.b16 %v82
    %v721 = vunpack.c.l.b16 %v83
    %v722 = vunpack.c.h.b16 %v83
    %v723 = vunpack.c.l.b16 %v84
    %v724 = vunpack.c.h.b16 %v84
    %v725 = vunpack.c.l.b16 %v85
    %v726 = vunpack.c.h.b16 %v85
    %v727 = vunpack.c.l.b16 %v86
    %v728 = vunpack.c.h.b16 %v86
    %v729 = vunpack.c.l.b16 %v87
    %v730 = vunpack.c.h.b16 %v87
    %v731 = vunpack.c.l.b16 %v88
    %v732 = vunpack.c.h.b16 %v88
    %v733 = vunpack.c.l.b16 %v89
    %v734 = vunpack.c.h.b16 %v89
    %v735 = vunpack.c.l.b16 %v90
    %v736 = vunpack.c.h.b16 %v90
    %v737 = vunpack.c.l.b16 %v91
    %v738 = vunpack.c.h.b16 %v91
    %v739 = vunpack.c.l.b16 %v92
    %v740 = vunpack.c.h.b16 %v92
    %v741 = vunpack.c.l.b16 %v93
    %v742 = vunpack.c.h.b16 %v93
    %v743 = vunpack.c.l.b16 %v94
    %v744 = vunpack.c.h.b16 %v94
    %v745 = vunpack.c.l.b16 %v95
    %v746 = vunpack.c.h.b16 %v95
    %v747 = vunpack.c.l.b16 %v96
    %v748 = vunpack.c.h.b16 %v96
    %v749 = vunpack.c.l.b16 %v97
    %v750 = vunpack.c.h.b16 %v97
    %v751 = vunpack.c.l.b16 %v98
    %v752 = vunpack.c.h.b16 %v98
    %v753 = vunpack.c.l.b16 %v99
    %v754 = vunpack.c.h.b16 %v99
    %v755 = vunpack.c.l.b16 %v100
    %v756 = vunpack.c.h.b16 %v100
    %v757 = vunpack.c.l.b16 %v101
    %v758 = vunpack.c.h.b16 %v101
    %v759 = vunpack.c.l.b16 %v102
    %v760 = vunpack.c.h.b16 %v102
    %v761 = vunpack.c.l.b16 %v103
    %v762 = vunpack.c.h.b16 %v103
    %v763 = vunpack.c.l.b16 %v104
    %v764 = vunpack.c.h.b16 %v104
    %v765 = vunpack.c.l.b16 %v105
    %v766 = vunpack.c.h.b16 %v105
    %v767 = vunpack.c.l.b16 %v106
    %v768 = vunpack.c.h.b16 %v106
    %v769 = vunpack.c.l.b16 %v107
    %v770 = vunpack.c.h.b16 %v107
    %v771 = vunpack.c.l.b16 %v108
    %v772 = vunpack.c.h.b16 %v108
    %v773 = vunpack.c.l.b16 %v109
    %v774 = vunpack.c.h.b16 %v109
    %v775 = vunpack.c.l.b16 %v110
    %v776 = vunpack.c.h.b16 %v110
    %v777 = vunpack.c.l.b16 %v111
    %v778 = vunpack.c.h.b16 %v111
    %v779 = vunpack.c.l.b16 %v112
    %v780 = vunpack.c.h.b16 %v112
    %v781 = vunpack.c.l.b16 %v113
    %v782 = vunpack.c.h.b16 %v113
    %v783 = vunpack.c.l.b16 %v114
    %v784 = vunpack.c.h.b16 %v114
    %v785 = vunpack.c.l.b16 %v115
    %v786 = vunpack.c.h.b16 %v115
    %v787 = vunpack.c.l.b16 %v116
    %v788 = vunpack.c.h.b16 %v116
    %v789 = vunpack.c.l.b16 %v117
    %v790 = vunpack.c.h.b16 %v117
    %v791 = vunpack.c.l.b16 %v118
    %v792 = vunpack.c.h.b16 %v118
    %v793 = vunpack.c.l.b16 %v119
    %v794 = vunpack.c.h.b16 %v119
    %v795 = vunpack.c.l.b16 %v120
    %v796 = vunpack.c.h.b16 %v120
    %v797 = vunpack.c.l.b16 %v121
    %v798 = vunpack.c.h.b16 %v121
    %v799 = vunpack.c.l.b16 %v122
    %v800 = vunpack.c.h.b16 %v122
    %v801 = vunpack.c.l.b16 %v123
    %v802 = vunpack.c.h.b16 %v123
    %v803 = vunpack.c.l.b16 %v124
    %v804 = vunpack.c.h.b16 %v124
    %v805 = vunpack.c.l.b16 %v125
    %v806 = vunpack.c.h.b16 %v125
    %v807 = vunpack.c.l.b16 %v126
    %v808 = vunpack.c.h.b16 %v126
    %v809 = vunpack.c.l.b16 %v127
    %v810 = vunpack.c.h.b16 %v127
    %v811 = vunpack.c.l.b16 %v128
    %v812 = vunpack.c.h.b16 %v128
    %v813 = vunpack.c.l.b16 %v129
    %v814 = vunpack.c.h.b16 %v129
    %v815 = vunpack.c.l.b16 %v130
    %v816 = vunpack.c.h.b16 %v130
    %v817 = vunpack.c.l.b16 %v131
    %v818 = vunpack.c.h.b16 %v131
    %v819 = vunpack.c.l.b16 %v132
    %v820 = vunpack.c.h.b16 %v132
    %v821 = vunpack.c.l.b16 %v133
    %v822 = vunpack.c.h.b16 %v133
    %v823 = vunpack.c.l.b16 %v134
    %v824 = vunpack.c.h.b16 %v134
    %v825 = vunpack.c.l.b16 %v135
    %v826 = vunpack.c.h.b16 %v135
    %v827 = vunpack.c.l.b16 %v136
    %v828 = vunpack.c.h.b16 %v136
    %v829 = vunpack.c.l.b16 %v137
    %v830 = vunpack.c.h.b16 %v137
    %v831 = vunpack.c.l.b16 %v138
    %v832 = vunpack.c.h.b16 %v138
    %v833 = vunpack.c.l.b16 %v139
    %v834 = vunpack.c.h.b16 %v139
    %v835 = vunpack.c.l.b16 %v140
    %v836 = vunpack.c.h.b16 %v140
    %v837 = vunpack.c.l.b16 %v141
    %v838 = vunpack.c.h.b16 %v141
    %v839 = vunpack.c.l.b16 %v142
    %v840 = vunpack.c.h.b16 %v142
    %v841 = vunpack.c.l.b16 %v143
    %v842 = vunpack.c.h.b16 %v143
    %v843 = vunpack.c.l.b16 %v144
    %v844 = vunpack.c.h.b16 %v144
    %v845 = vunpack.c.l.b16 %v145
    %v846 = vunpack.c.h.b16 %v145
    %v847 = vunpack.c.l.b16 %v146
    %v848 = vunpack.c.h.b16 %v146
    %v849 = vunpack.c.l.b16 %v147
    %v850 = vunpack.c.h.b16 %v147
    %v851 = vunpack.c.l.b16 %v148
    %v852 = vunpack.c.h.b16 %v148
    %v853 = vunpack.c.l.b16 %v149
    %v854 = vunpack.c.h.b16 %v149
    %v855 = vunpack.c.l.b16 %v150
    %v856 = vunpack.c.h.b16 %v150
    %v857 = vunpack.c.l.b16 %v151
    %v858 = vunpack.c.h.b16 %v151
    %v859 = vunpack.c.l.b16 %v152
    %v860 = vunpack.c.h.b16 %v152
    %v861 = vunpack.c.l.b16 %v153
    %v862 = vunpack.c.h.b16 %v153
    %v863 = vunpack.c.l.b16 %v154
    %v864 = vunpack.c.h.b16 %v154
    %v865 = vunpack.c.l.b16 %v155
    %v866 = vunpack.c.h.b16 %v155
    %v867 = vunpack.c.l.b16 %v156
    %v868 = vunpack.c.h.b16 %v156
    %v869 = vunpack.c.l.b16 %v157
    %v870 = vunpack.c.h.b16 %v157
    %v871 = vunpack.c.l.b16 %v158
    %v872 = vunpack.c.h.b16 %v158
    %v873 = vunpack.c.l.b16 %v159
    %v874 = vunpack.c.h.b16 %v159
    %v875 = vunpack.c.l.b16 %v160
    %v876 = vunpack.c.h.b16 %v160
    %v877 = vunpack.c.l.b16 %v161
    %v878 = vunpack.c.h.b16 %v161
    %v879 = vunpack.c.l.b16 %v162
    %v880 = vunpack.c.h.b16 %v162
    %v881 = vunpack.c.l.b16 %v163
    %v882 = vunpack.c.h.b16 %v163
    %v883 = vunpack.c.l.b16 %v164
    %v884 = vunpack.c.h.b16 %v164
    %v885 = vunpack.c.l.b16 %v165
    %v886 = vunpack.c.h.b16 %v165
    %v887 = vunpack.c.l.b16 %v166
    %v888 = vunpack.c.h.b16 %v166
    %v889 = vunpack.c.l.b16 %v167
    %v890 = vunpack.c.h.b16 %v167
    %v891 = vunpack.c.l.b16 %v168
    %v892 = vunpack.c.h.b16 %v168
    %v893 = vunpack.c.l.b16 %v169
    %v894 = vunpack.c.h.b16 %v169
    %v895 = vunpack.c.l.b16 %v170
    %v896 = vunpack.c.h.b16 %v170
    %v897 = vunpack.c.l.b16 %v171
    %v898 = vunpack.c.h.b16 %v171
    %v899 = vunpack.c.l.b16 %v172
    %v900 = vunpack.c.h.b16 %v172
    %v901 = vunpack.c.l.b16 %v173
    %v902 = vunpack.c.h.b16 %v173
    %v903 = vunpack.c.l.b16 %v174
    %v904 = vunpack.c.h.b16 %v174
    %v905 = vunpack.c.l.b16 %v175
    %v906 = vunpack.c.h.b16 %v175
    %v907 = vunpack.c.l.b16 %v176
    %v908 = vunpack.c.h.b16 %v176
    %v909 = vunpack.c.l.b16 %v177
    %v910 = vunpack.c.h.b16 %v177
    %v911 = vunpack.c.l.b16 %v178
    %v912 = vunpack.c.h.b16 %v178
    %v913 = vunpack.c.l.b16 %v179
    %v914 = vunpack.c.h.b16 %v179
    %v915 = vunpack.c.l.b16 %v180
    %v916 = vunpack.c.h.b16 %v180
    %v917 = vunpack.c.l.b16 %v181
    %v918 = vunpack.c.h.b16 %v181
    %v919 = vunpack.c.l.b16 %v182
    %v920 = vunpack.c.h.b16 %v182
    %v921 = vunpack.c.l.b16 %v183
    %v922 = vunpack.c.h.b16 %v183
    %v923 = vunpack.c.l.b16 %v184
    %v924 = vunpack.c.h.b16 %v184
    %v925 = vunpack.c.l.b16 %v185
    %v926 = vunpack.c.h.b16 %v185
    %v927 = vunpack.c.l.b16 %v186
    %v928 = vunpack.c.h.b16 %v186
    %v929 = vunpack.c.l.b16 %v187
    %v930 = vunpack.c.h.b16 %v187
    %v931 = vunpack.c.l.b16 %v188
    %v932 = vunpack.c.h.b16 %v188
    %v933 = vunpack.c.l.b16 %v189
    %v934 = vunpack.c.h.b16 %v189
    %v935 = vunpack.c.l.b16 %v190
    %v936 = vunpack.c.h.b16 %v190
    %v937 = vunpack.c.l.b16 %v191
    %v938 = vunpack.c.h.b16 %v191
    %v939 = vunpack.c.l.b16 %v192
    %v940 = vunpack.c.h.b16 %v192
    %v941 = vunpack.c.l.b16 %v193
    %v942 = vunpack.c.h.b16 %v193
    %v943 = vunpack.c.l.b16 %v194
    %v944 = vunpack.c.h.b16 %v194
    %v945 = vunpack.c.l.b16 %v195
    %v946 = vunpack.c.h.b16 %v195
    %v947 = vunpack.c.l.b16 %v196
    %v948 = vunpack.c.h.b16 %v196
    %v949 = vunpack.c.l.b16 %v197
    %v950 = vunpack.c.h.b16 %v197
    %v951 = vunpack.c.l.b16 %v198
    %v952 = vunpack.c.h.b16 %v198
    %v953 = vunpack.c.l.b16 %v199
    %v954 = vunpack.c.h.b16 %v199
    %v955 = vunpack.c.l.b16 %v200
    %v956 = vunpack.c.h.b16 %v200
    %v957 = vunpack.c.l.b16 %v201
    %v958 = vunpack.c.h.b16 %v201
    %v959 = vunpack.c.l.b16 %v202
    %v960 = vunpack.c.h.b16 %v202
    %v961 = vunpack.c.l.b16 %v203
    %v962 = vunpack.c.h.b16 %v203
    %v963 = vunpack.c.l.b16 %v204
    %v964 = vunpack.c.h.b16 %v204
    %v965 = vunpack.c.l.b16 %v205
    %v966 = vunpack.c.h.b16 %v205
    %v967 = vunpack.c.l.b16 %v206
    %v968 = vunpack.c.h.b16 %v206
    %v969 = vunpack.c.l.b16 %v207
    %v970 = vunpack.c.h.b16 %v207
    %v971 = vunpack.c.l.b16 %v208
    %v972 = vunpack.c.h.b16 %v208
    %v973 = vunpack.c.l.b16 %v209
    %v974 = vunpack.c.h.b16 %v209
    %v975 = vunpack.c.l.b16 %v210
    %v976 = vunpack.c.h.b16 %v210
    %v977 = vunpack.c.l.b16 %v211
    %v978 = vunpack.c.h.b16 %v211
    %v979 = vunpack.c.l.b16 %v212
    %v980 = vunpack.c.h.b16 %v212
    %v981 = vunpack.c.l.b16 %v213
    %v982 = vunpack.c.h.b16 %v213
    %v983 = vunpack.c.l.b16 %v214
    %v984 = vunpack.c.h.b16 %v214
    %v985 = vunpack.c.l.b16 %v215
    %v986 = vunpack.c.h.b16 %v215
    %v987 = vunpack.c.l.b16 %v216
    %v988 = vunpack.c.h.b16 %v216
    %v989 = vunpack.c.l.b16 %v217
    %v990 = vunpack.c.h.b16 %v217
    %v991 = vunpack.c.l.b16 %v218
    %v992 = vunpack.c.h.b16 %v218
    %v993 = vunpack.c.l.b16 %v219
    %v994 = vunpack.c.h.b16 %v219
    %v995 = vunpack.c.l.b16 %v220
    %v996 = vunpack.c.h.b16 %v220
    %v997 = vunpack.c.l.b16 %v221
    %v998 = vunpack.c.h.b16 %v221
    %v999 = vunpack.c.l.b16 %v222
    %v1000 = vunpack.c.h.b16 %v222
    %v1001 = vunpack.c.l.b16 %v223
    %v1002 = vunpack.c.h.b16 %v223
    %v1003 = vunpack.c.l.b16 %v224
    %v1004 = vunpack.c.h.b16 %v224
    %v1005 = vunpack.c.l.b16 %v225
    %v1006 = vunpack.c.h.b16 %v225
    %v1007 = vunpack.c.l.b16 %v226
    %v1008 = vunpack.c.h.b16 %v226
    %v1009 = vunpack.c.l.b16 %v227
    %v1010 = vunpack.c.h.b16 %v227
    %v1011 = vunpack.c.l.b16 %v228
    %v1012 = vunpack.c.h.b16 %v228
    %v1013 = vunpack.c.l.b16 %v229
    %v1014 = vunpack.c.h.b16 %v229
    %v1015 = vunpack.c.l.b16 %v230
    %v1016 = vunpack.c.h.b16 %v230
    %v1017 = vunpack.c.l.b16 %v231
    %v1018 = vunpack.c.h.b16 %v231
    %v1019 = vunpack.c.l.b16 %v232
    %v1020 = vunpack.c.h.b16 %v232
    %v1021 = vunpack.c.l.b16 %v233
    %v1022 = vunpack.c.h.b16 %v233
    %v1023 = vunpack.c.l.b16 %v234
    %v1024 = vunpack.c.h.b16 %v234
    %v1025 = vunpack.c.l.b16 %v235
    %v1026 = vunpack.c.h.b16 %v235
    %v1027 = vunpack.c.l.b16 %v236
    %v1028 = vunpack.c.h.b16 %v236
    %v1029 = vunpack.c.l.b16 %v237
    %v1030 = vunpack.c.h.b16 %v237
    %v1031 = vunpack.c.l.b16 %v238
    %v1032 = vunpack.c.h.b16 %v238
    %v1033 = vunpack.c.l.b16 %v239
    %v1034 = vunpack.c.h.b16 %v239
    %v1035 = vunpack.c.l.b16 %v240
    %v1036 = vunpack.c.h.b16 %v240
    %v1037 = vunpack.c.l.b16 %v241
    %v1038 = vunpack.c.h.b16 %v241
    %v1039 = vunpack.c.l.b16 %v242
    %v1040 = vunpack.c.h.b16 %v242
    %v1041 = vunpack.c.l.b16 %v243
    %v1042 = vunpack.c.h.b16 %v243
    %v1043 = vunpack.c.l.b16 %v244
    %v1044 = vunpack.c.h.b16 %v244
    %v1045 = vunpack.c.l.b16 %v245
    %v1046 = vunpack.c.h.b16 %v245
    %v1047 = vunpack.c.l.b16 %v246
    %v1048 = vunpack.c.h.b16 %v246
    %v1049 = vunpack.c.l.b16 %v247
    %v1050 = vunpack.c.h.b16 %v247
    %v1051 = vunpack.c.l.b16 %v248
    %v1052 = vunpack.c.h.b16 %v248
    %v1053 = vunpack.c.l.b16 %v249
    %v1054 = vunpack.c.h.b16 %v249
    %v1055 = vunpack.c.l.b16 %v250
    %v1056 = vunpack.c.h.b16 %v250
    %v1057 = vunpack.c.l.b16 %v251
    %v1058 = vunpack.c.h.b16 %v251
    %v1059 = vunpack.c.l.b16 %v252
    %v1060 = vunpack.c.h.b16 %v252
    %v1061 = vunpack.c.l.b16 %v253
    %v1062 = vunpack.c.h.b16 %v253
    %v1063 = vunpack.c.l.b16 %v254
    %v1064 = vunpack.c.h.b16 %v254
    %v1065 = vunpack.c.l.b16 %v255
    %v1066 = vunpack.c.h.b16 %v255
    %v1067 = vunpack.c.l.b16 %v256
    %v1068 = vunpack.c.h.b16 %v256
    %v1069 = vunpack.c.l.b16 %v257
    %v1070 = vunpack.c.h.b16 %v257
    %v1071 = vunpack.c.l.b16 %v258
    %v1072 = vunpack.c.h.b16 %v258
    %v1073 = vunpack.c.l.b16 %v259
    %v1074 = vunpack.c.h.b16 %v259
    %v1075 = vunpack.c.l.b16 %v260
    %v1076 = vunpack.c.h.b16 %v260
    %v1077 = vunpack.c.l.b16 %v261
    %v1078 = vunpack.c.h.b16 %v261
    %v1079 = vunpack.c.l.b16 %v262
    %v1080 = vunpack.c.h.b16 %v262
    %v1081 = vunpack.c.l.b16 %v263
    %v1082 = vunpack.c.h.b16 %v263
    %v1083 = vunpack.c.l.b16 %v264
    %v1084 = vunpack.c.h.b16 %v264
    %v1085 = vunpack.c.l.b16 %v265
    %v1086 = vunpack.c.h.b16 %v265
    %v1087 = vunpack.c.l.b16 %v266
    %v1088 = vunpack.c.h.b16 %v266
    %v1089 = vunpack.c.l.b16 %v267
    %v1090 = vunpack.c.h.b16 %v267
    %v1091 = vunpack.c.l.b16 %v268
    %v1092 = vunpack.c.h.b16 %v268
    %v1093 = vunpack.c.l.b16 %v269
    %v1094 = vunpack.c.h.b16 %v269
    %v1095 = vunpack.c.l.b16 %v270
    %v1096 = vunpack.c.h.b16 %v270
    %v1097 = vunpack.c.l.b16 %v271
    %v1098 = vunpack.c.h.b16 %v271
    %v1099 = vunpack.c.l.b16 %v272
    %v1100 = vunpack.c.h.b16 %v272
    %v1101 = vunpack.c.l.b16 %v273
    %v1102 = vunpack.c.h.b16 %v273
    %v1103 = vunpack.c.l.b16 %v274
    %v1104 = vunpack.c.h.b16 %v274
    %v1105 = vpack.c.b16 %v601, %v593
    %v1106 = vpack.c.b16 %v602, %v594
    %v1107 = vpack.c.b16 %v603, %v595
    %v1108 = vpack.c.b16 %v604, %v596
    %v1109 = vpack.c.b16 %v605, %v597
    %v1110 = vpack.c.b16 %v606, %v598
    %v1111 = vpack.c.b16 %v607, %v599
    %v1112 = vpack.c.b16 %v608, %v600
    %v1113 = vpack.c.b16 %v617, %v609
    %v1114 = vpack.c.b16 %v618, %v610
    %v1115 = vpack.c.b16 %v619, %v611
    %v1116 = vpack.c.b16 %v620, %v612
    %v1117 = vpack.c.b16 %v621, %v613
    %v1118 = vpack.c.b16 %v622, %v614
    %v1119 = vpack.c.b16 %v623, %v615
    %v1120 = vpack.c.b16 %v624, %v616
    %v1121 = vpack.c.b16 %v633, %v625
    %v1122 = vpack.c.b16 %v634, %v626
    %v1123 = vpack.c.b16 %v635, %v627
    %v1124 = vpack.c.b16 %v636, %v628
    %v1125 = vpack.c.b16 %v637, %v629
    %v1126 = vpack.c.b16 %v638, %v630
    %v1127 = vpack.c.b16 %v639, %v631
    %v1128 = vpack.c.b16 %v640, %v632
    %v1129 = vpack.c.b16 %v649, %v641
    %v1130 = vpack.c.b16 %v650, %v642
    %v1131 = vpack.c.b16 %v651, %v643
    %v1132 = vpack.c.b16 %v652, %v644
    %v1133 = vpack.c.b16 %v653, %v645
    %v1134 = vpack.c.b16 %v654, %v646
    %v1135 = vpack.c.b16 %v655, %v647
    %v1136 = vpack.c.b16 %v656, %v648
    %v1137 = vpack.c.b16 %v665, %v657
    %v1138 = vpack.c.b16 %v666, %v658
    %v1139 = vpack.c.b16 %v667, %v659
    %v1140 = vpack.c.b16 %v668, %v660
    %v1141 = vpack.c.b16 %v669, %v661
    %v1142 = vpack.c.b16 %v670, %v662
    %v1143 = vpack.c.b16 %v671, %v663
    %v1144 = vpack.c.b16 %v672, %v664
    %v1145 = vpack.c.b16 %v681, %v673
    %v1146 = vpack.c.b16 %v682, %v674
    %v1147 = vpack.c.b16 %v683, %v675
    %v1148 = vpack.c.b16 %v684, %v676
    %v1149 = vpack.c.b16 %v685, %v677
    %v1150 = vpack.c.b16 %v686, %v678
    %v1151 = vpack.c.b16 %v687, %v679
    %v1152 = vpack.c.b16 %v688, %v680
    %v1153 = vpack.c.b16 %v697, %v689
    %v1154 = vpack.c.b16 %v698, %v690
    %v1155 = vpack.c.b16 %v699, %v691
    %v1156 = vpack.c.b16 %v700, %v692
    %v1157 = vpack.c.b16 %v701, %v693
    %v1158 = vpack.c.b16 %v702, %v694
    %v1159 = vpack.c.b16 %v703, %v695
    %v1160 = vpack.c.b16 %v704, %v696
    %v1161 = vpack.c.b16 %v713, %v705
    %v1162 = vpack.c.b16 %v714, %v706
    %v1163 = vpack.c.b16 %v715, %v707
    %v1164 = vpack.c.b16 %v716, %v708
    %v1165 = vpack.c.b16 %v717, %v709
    %v1166 = vpack.c.b16 %v718, %v710
    %v1167 = vpack.c.b16 %v719, %v711
    %v1168 = vpack.c.b16 %v720, %v712
    %v1169 = vpack.c.b16 %v729, %v721
    %v1170 = vpack.c.b16 %v730, %v722
    %v1171 = vpack.c.b16 %v731, %v723
    %v1172 = vpack.c.b16 %v732, %v724
    %v1173 = vpack.c.b16 %v733, %v725
    %v1174 = vpack.c.b16 %v734, %v726
    %v1175 = vpack.c.b16 %v735, %v727
    %v1176 = vpack.c.b16 %v736, %v728
    %v1177 = vpack.c.b16 %v745, %v737
    %v1178 = vpack.c.b16 %v746, %v738
    %v1179 = vpack.c.b16 %v747, %v739
    %v1180 = vpack.c.b16 %v748, %v740
    %v1181 = vpack.c.b16 %v749, %v741
    %v1182 = vpack.c.b16 %v750, %v742
    %v1183 = vpack.c.b16 %v751, %v743
    %v1184 = vpack.c.b16 %v752, %v744
    %v1185 = vpack.c.b16 %v761, %v753
    %v1186 = vpack.c.b16 %v762, %v754
    %v1187 = vpack.c.b16 %v763, %v755
    %v1188 = vpack.c.b16 %v764, %v756
    %v1189 = vpack.c.b16 %v765, %v757
    %v1190 = vpack.c.b16 %v766, %v758
    %v1191 = vpack.c.b16 %v767, %v759
    %v1192 = vpack.c.b16 %v768, %v760
    %v1193 = vpack.c.b16 %v777, %v769
    %v1194 = vpack.c.b16 %v778, %v770
    %v1195 = vpack.c.b16 %v779, %v771
    %v1196 = vpack.c.b16 %v780, %v772
    %v1197 = vpack.c.b16 %v781, %v773
    %v1198 = vpack.c.b16 %v782, %v774
    %v1199 = vpack.c.b16 %v783, %v775
    %v1200 = vpack.c.b16 %v784, %v776
    %v1201 = vpack.c.b16 %v793, %v785
    %v1202 = vpack.c.b16 %v794, %v786
    %v1203 = vpack.c.b16 %v795, %v787
    %v1204 = vpack.c.b16 %v796, %v788
    %v1205 = vpack.c.b16 %v797, %v789
    %v1206 = vpack.c.b16 %v798, %v790
    %v1207 = vpack.c.b16 %v799, %v791
    %v1208 = vpack.c.b16 %v800, %v792
    %v1209 = vpack.c.b16 %v809, %v801
    %v1210 = vpack.c.b16 %v810, %v802
    %v1211 = vpack.c.b16 %v811, %v803
    %v1212 = vpack.c.b16 %v812, %v804
    %v1213 = vpack.c.b16 %v813, %v805
    %v1214 = vpack.c.b16 %v814, %v806
    %v1215 = vpack.c.b16 %v815, %v807
    %v1216 = vpack.c.b16 %v816, %v808
    %v1217 = vpack.c.b16 %v825, %v817
    %v1218 = vpack.c.b16 %v826, %v818
    %v1219 = vpack.c.b16 %v827, %v819
    %v1220 = vpack.c.b16 %v828, %v820
    %v1221 = vpack.c.b16 %v829, %v821
    %v1222 = vpack.c.b16 %v830, %v822
    %v1223 = vpack.c.b16 %v831, %v823
    %v1224 = vpack.c.b16 %v832, %v824
    %v1225 = vpack.c.b16 %v841, %v833
    %v1226 = vpack.c.b16 %v842, %v834
    %v1227 = vpack.c.b16 %v843, %v835
    %v1228 = vpack.c.b16 %v844, %v836
    %v1229 = vpack.c.b16 %v845, %v837
    %v1230 = vpack.c.b16 %v846, %v838
    %v1231 = vpack.c.b16 %v847, %v839
    %v1232 = vpack.c.b16 %v848, %v840
    %v1233 = vpack.c.b16 %v857, %v849
    %v1234 = vpack.c.b16 %v858, %v850
    %v1235 = vpack.c.b16 %v859, %v851
    %v1236 = vpack.c.b16 %v860, %v852
    %v1237 = vpack.c.b16 %v861, %v853
    %v1238 = vpack.c.b16 %v862, %v854
    %v1239 = vpack.c.b16 %v863, %v855
    %v1240 = vpack.c.b16 %v864, %v856
    %v1241 = vpack.c.b16 %v873, %v865
    %v1242 = vpack.c.b16 %v874, %v866
    %v1243 = vpack.c.b16 %v875, %v867
    %v1244 = vpack.c.b16 %v876, %v868
    %v1245 = vpack.c.b16 %v877, %v869
    %v1246 = vpack.c.b16 %v878, %v870
    %v1247 = vpack.c.b16 %v879, %v871
    %v1248 = vpack.c.b16 %v880, %v872
    %v1249 = vpack.c.b16 %v889, %v881
    %v1250 = vpack.c.b16 %v890, %v882
    %v1251 = vpack.c.b16 %v891, %v883
    %v1252 = vpack.c.b16 %v892, %v884
    %v1253 = vpack.c.b16 %v893, %v885
    %v1254 = vpack.c.b16 %v894, %v886
    %v1255 = vpack.c.b16 %v895, %v887
    %v1256 = vpack.c.b16 %v896, %v888
    %v1257 = vpack.c.b16 %v905, %v897
    %v1258 = vpack.c.b16 %v906, %v898
    %v1259 = vpack.c.b16 %v907, %v899
    %v1260 = vpack.c.b16 %v908, %v900
    %v1261 = vpack.c.b16 %v909, %v901
    %v1262 = vpack.c.b16 %v910, %v902
    %v1263 = vpack.c.b16 %v911, %v903
    %v1264 = vpack.c.b16 %v912, %v904
    %v1265 = vpack.c.b16 %v921, %v913
    %v1266 = vpack.c.b16 %v922, %v914
    %v1267 = vpack.c.b16 %v923, %v915
    %v1268 = vpack.c.b16 %v924, %v916
    %v1269 = vpack.c.b16 %v925, %v917
    %v1270 = vpack.c.b16 %v926, %v918
    %v1271 = vpack.c.b16 %v927, %v919
    %v1272 = vpack.c.b16 %v928, %v920
    %v1273 = vpack.c.b16 %v937, %v929
    %v1274 = vpack.c.b16 %v938, %v930
    %v1275 = vpack.c.b16 %v939, %v931
    %v1276 = vpack.c.b16 %v940, %v932
    %v1277 = vpack.c.b16 %v941, %v933
    %v1278 = vpack.c.b16 %v942, %v934
    %v1279 = vpack.c.b16 %v943, %v935
    %v1280 = vpack.c.b16 %v944, %v936
    %v1281 = vpack.c.b16 %v953, %v945
    %v1282 = vpack.c.b16 %v954, %v946
    %v1283 = vpack.c.b16 %v955, %v947
    %v1284 = vpack.c.b16 %v956, %v948
    %v1285 = vpack.c.b16 %v957, %v949
    %v1286 = vpack.c.b16 %v958, %v950
    %v1287 = vpack.c.b16 %v959, %v951
    %v1288 = vpack.c.b16 %v960, %v952
    %v1289 = vpack.c.b16 %v969, %v961
    %v1290 = vpack.c.b16 %v970, %v962
    %v1291 = vpack.c.b16 %v971, %v963
    %v1292 = vpack.c.b16 %v972, %v964
    %v1293 = vpack.c.b16 %v973, %v965
    %v1294 = vpack.c.b16 %v974, %v966
    %v1295 = vpack.c.b16 %v975, %v967
    %v1296 = vpack.c.b16 %v976, %v968
    %v1297 = vpack.c.b16 %v985, %v977
    %v1298 = vpack.c.b16 %v986, %v978
    %v1299 = vpack.c.b16 %v987, %v979
    %v1300 = vpack.c.b16 %v988, %v980
    %v1301 = vpack.c.b16 %v989, %v981
    %v1302 = vpack.c.b16 %v990, %v982
    %v1303 = vpack.c.b16 %v991, %v983
    %v1304 = vpack.c.b16 %v992, %v984
    %v1305 = vpack.c.b16 %v1001, %v993
    %v1306 = vpack.c.b16 %v1002, %v994
    %v1307 = vpack.c.b16 %v1003, %v995
    %v1308 = vpack.c.b16 %v1004, %v996
    %v1309 = vpack.c.b16 %v1005, %v997
    %v1310 = vpack.c.b16 %v1006, %v998
    %v1311 = vpack.c.b16 %v1007, %v999
    %v1312 = vpack.c.b16 %v1008, %v1000
    %v1313 = vpack.c.b16 %v1017, %v1009
    %v1314 = vpack.c.b16 %v1018, %v1010
    %v1315 = vpack.c.b16 %v1019, %v1011
    %v1316 = vpack.c.b16 %v1020, %v1012
    %v1317 = vpack.c.b16 %v1021, %v1013
    %v1318 = vpack.c.b16 %v1022, %v1014
    %v1319 = vpack.c.b16 %v1023, %v1015
    %v1320 = vpack.c.b16 %v1024, %v1016
    %v1321 = vpack.c.b16 %v1033, %v1025
    %v1322 = vpack.c.b16 %v1034, %v1026
    %v1323 = vpack.c.b16 %v1035, %v1027
    %v1324 = vpack.c.b16 %v1036, %v1028
    %v1325 = vpack.c.b16 %v1037, %v1029
    %v1326 = vpack.c.b16 %v1038, %v1030
    %v1327 = vpack.c.b16 %v1039, %v1031
    %v1328 = vpack.c.b16 %v1040, %v1032
    %v1329 = vpack.c.b16 %v1049, %v1041
    %v1330 = vpack.c.b16 %v1050, %v1042
    %v1331 = vpack.c.b16 %v1051, %v1043
    %v1332 = vpack.c.b16 %v1052, %v1044
    %v1333 = vpack.c.b16 %v1053, %v1045
    %v1334 = vpack.c.b16 %v1054, %v1046
    %v1335 = vpack.c.b16 %v1055, %v1047
    %v1336 = vpack.c.b16 %v1056, %v1048
    %v1337 = vpack.c.b16 %v1065, %v1057
    %v1338 = vpack.c.b16 %v1066, %v1058
    %v1339 = vpack.c.b16 %v1067, %v1059
    %v1340 = vpack.c.b16 %v1068, %v1060
    %v1341 = vpack.c.b16 %v1069, %v1061
    %v1342 = vpack.c.b16 %v1070, %v1062
    %v1343 = vpack.c.b16 %v1071, %v1063
    %v1344 = vpack.c.b16 %v1072, %v1064
    %v1345 = vpack.c.b16 %v1081, %v1073
    %v1346 = vpack.c.b16 %v1082, %v1074
    %v1347 = vpack.c.b16 %v1083, %v1075
    %v1348 = vpack.c.b16 %v1084, %v1076
    %v1349 = vpack.c.b16 %v1085, %v1077
    %v1350 = vpack.c.b16 %v1086, %v1078
    %v1351 = vpack.c.b16 %v1087, %v1079
    %v1352 = vpack.c.b16 %v1088, %v1080
    %v1353 = vpack.c.b16 %v1097, %v1089
    %v1354 = vpack.c.b16 %v1098, %v1090
    %v1355 = vpack.c.b16 %v1099, %v1091
    %v1356 = vpack.c.b16 %v1100, %v1092
    %v1357 = vpack.c.b16 %v1101, %v1093
    %v1358 = vpack.c.b16 %v1102, %v1094
    %v1359 = vpack.c.b16 %v1103, %v1095
    %v1360 = vpack.c.b16 %v1104, %v1096
    %1617 = vmatprep.subr.bf16.mxu0 %v1162
    %1618 = vmatpush1.bf16.msra.mxu0 %v1161
    %1619 = vmatprep.subr.bf16.mxu0 %v1154
    %1620 = vmatpush1.bf16.msra.mxu0 %v1153
    %1621 = vmatprep.subr.bf16.mxu0 %v1146
    %1622 = vmatpush1.bf16.msra.mxu0 %v1145
    %1623 = vmatprep.subr.bf16.mxu0 %v1138
    %1624 = vmatpush1.bf16.msra.mxu0 %v1137
    %1625 = vmatprep.subr.bf16.mxu0 %v1130
    %1626 = vmatpush1.bf16.msra.mxu0 %v1129
    %1627 = vmatprep.subr.bf16.mxu0 %v1122
    %1628 = vmatpush1.bf16.msra.mxu0 %v1121
    %1629 = vmatprep.subr.bf16.mxu0 %v1114
    %1630 = vmatpush1.bf16.msra.mxu0 %v1113
    %1631 = vmatprep.subr.bf16.mxu0 %v1106
    %1632 = vmatpush1.bf16.msra.mxu0 %v1105
    %1633 = vmatprep.subr.bf16.mxu0 %v1226
    %1634 = vmatpush2.bf16.msra.mxu0 %v1225
    %1635 = vmatprep.subr.bf16.mxu0 %v1218
    %1636 = vmatpush2.bf16.msra.mxu0 %v1217
    %1637 = vmatprep.subr.bf16.mxu0 %v1210
    %1638 = vmatpush2.bf16.msra.mxu0 %v1209
    %1639 = vmatprep.subr.bf16.mxu0 %v1202
    %1640 = vmatpush2.bf16.msra.mxu0 %v1201
    %1641 = vmatprep.subr.bf16.mxu0 %v1194
    %1642 = vmatpush2.bf16.msra.mxu0 %v1193
    %1643 = vmatprep.subr.bf16.mxu0 %v1186
    %1644 = vmatpush2.bf16.msra.mxu0 %v1185
    %1645 = vmatprep.subr.bf16.mxu0 %v1178
    %1646 = vmatpush2.bf16.msra.mxu0 %v1177
    %1647 = vmatprep.subr.bf16.mxu0 %v1170
    %1648 = vmatpush2.bf16.msra.mxu0 %v1169
    %1649 = vmatprep.mubr.bf16.mxu0 %v330
    %1650 = vmatmul.mubr.bf16.gmra.mxu0 %v329
    %v1651 = vpop.f32.mrf.mxu0
    %v1652 = vadd.f32 %v280, %v1651
    %v1653 = vpop.f32.mrf.mxu0
    %v1654 = vadd.f32 %v284, %v1653
    %v1655 = vpop.f32.mrf.mxu0
    %v1656 = vadd.f32 %v280, %v1655
    %v1657 = vpop.f32.mrf.mxu0
    %v1658 = vadd.f32 %v284, %v1657
    %1659 = vdwg.mxu0
    %1660 = vmatprep.subr.bf16.mxu0 %v1290
    %1661 = vmatpush1.bf16.msra.mxu0 %v1289
    %1662 = vmatprep.subr.bf16.mxu0 %v1282
    %1663 = vmatpush1.bf16.msra.mxu0 %v1281
    %1664 = vmatprep.subr.bf16.mxu0 %v1274
    %1665 = vmatpush1.bf16.msra.mxu0 %v1273
    %1666 = vmatprep.subr.bf16.mxu0 %v1266
    %1667 = vmatpush1.bf16.msra.mxu0 %v1265
    %1668 = vmatprep.subr.bf16.mxu0 %v1258
    %1669 = vmatpush1.bf16.msra.mxu0 %v1257
    %1670 = vmatprep.subr.bf16.mxu0 %v1250
    %1671 = vmatpush1.bf16.msra.mxu0 %v1249
    %1672 = vmatprep.subr.bf16.mxu0 %v1242
    %1673 = vmatpush1.bf16.msra.mxu0 %v1241
    %1674 = vmatprep.subr.bf16.mxu0 %v1234
    %1675 = vmatpush1.bf16.msra.mxu0 %v1233
    %1676 = vmatprep.subr.bf16.mxu0 %v1354
    %1677 = vmatpush2.bf16.msra.mxu0 %v1353
    %1678 = vmatprep.subr.bf16.mxu0 %v1346
    %1679 = vmatpush2.bf16.msra.mxu0 %v1345
    %1680 = vmatprep.subr.bf16.mxu0 %v1338
    %1681 = vmatpush2.bf16.msra.mxu0 %v1337
    %1682 = vmatprep.subr.bf16.mxu0 %v1330
    %1683 = vmatpush2.bf16.msra.mxu0 %v1329
    %1684 = vmatprep.subr.bf16.mxu0 %v1322
    %1685 = vmatpush2.bf16.msra.mxu0 %v1321
    %1686 = vmatprep.subr.bf16.mxu0 %v1314
    %1687 = vmatpush2.bf16.msra.mxu0 %v1313
    %1688 = vmatprep.subr.bf16.mxu0 %v1306
    %1689 = vmatpush2.bf16.msra.mxu0 %v1305
    %1690 = vmatprep.subr.bf16.mxu0 %v1298
    %1691 = vmatpush2.bf16.msra.mxu0 %v1297
    %1692 = vmatprep.mubr.bf16.mxu0 %v332
    %1693 = vmatmul.mubr.bf16.gmra.mxu0 %v331
    %v1694 = vpop.f32.mrf.mxu0
    %v1695 = vadd.f32 %v1652, %v1694
    %v1696 = vpop.f32.mrf.mxu0
    %v1697 = vadd.f32 %v1654, %v1696
    %v1698 = vpop.f32.mrf.mxu0
    %v1699 = vadd.f32 %v1656, %v1698
    %v1700 = vpop.f32.mrf.mxu0
    %v1701 = vadd.f32 %v1658, %v1700
    %1702 = vdwg.mxu0
    %1703 = vmatprep.subr.bf16.mxu0 %v1164
    %1704 = vmatpush1.bf16.msra.mxu0 %v1163
    %1705 = vmatprep.subr.bf16.mxu0 %v1156
    %1706 = vmatpush1.bf16.msra.mxu0 %v1155
    %1707 = vmatprep.subr.bf16.mxu0 %v1148
    %1708 = vmatpush1.bf16.msra.mxu0 %v1147
    %1709 = vmatprep.subr.bf16.mxu0 %v1140
    %1710 = vmatpush1.bf16.msra.mxu0 %v1139
    %1711 = vmatprep.subr.bf16.mxu0 %v1132
    %1712 = vmatpush1.bf16.msra.mxu0 %v1131
    %1713 = vmatprep.subr.bf16.mxu0 %v1124
    %1714 = vmatpush1.bf16.msra.mxu0 %v1123
    %1715 = vmatprep.subr.bf16.mxu0 %v1116
    %1716 = vmatpush1.bf16.msra.mxu0 %v1115
    %1717 = vmatprep.subr.bf16.mxu0 %v1108
    %1718 = vmatpush1.bf16.msra.mxu0 %v1107
    %1719 = vmatprep.subr.bf16.mxu0 %v1228
    %1720 = vmatpush2.bf16.msra.mxu0 %v1227
    %1721 = vmatprep.subr.bf16.mxu0 %v1220
    %1722 = vmatpush2.bf16.msra.mxu0 %v1219
    %1723 = vmatprep.subr.bf16.mxu0 %v1212
    %1724 = vmatpush2.bf16.msra.mxu0 %v1211
    %1725 = vmatprep.subr.bf16.mxu0 %v1204
    %1726 = vmatpush2.bf16.msra.mxu0 %v1203
    %1727 = vmatprep.subr.bf16.mxu0 %v1196
    %1728 = vmatpush2.bf16.msra.mxu0 %v1195
    %1729 = vmatprep.subr.bf16.mxu0 %v1188
    %1730 = vmatpush2.bf16.msra.mxu0 %v1187
    %1731 = vmatprep.subr.bf16.mxu0 %v1180
    %1732 = vmatpush2.bf16.msra.mxu0 %v1179
    %1733 = vmatprep.subr.bf16.mxu0 %v1172
    %1734 = vmatpush2.bf16.msra.mxu0 %v1171
    %1735 = vmatprep.mubr.bf16.mxu0 %v330
    %1736 = vmatmul.mubr.bf16.gmra.mxu0 %v329
    %v1737 = vpop.f32.mrf.mxu0
    %v1738 = vadd.f32 %v288, %v1737
    %v1739 = vpop.f32.mrf.mxu0
    %v1740 = vadd.f32 %v292, %v1739
    %v1741 = vpop.f32.mrf.mxu0
    %v1742 = vadd.f32 %v288, %v1741
    %v1743 = vpop.f32.mrf.mxu0
    %v1744 = vadd.f32 %v292, %v1743
    %1745 = vdwg.mxu0
    %1746 = vmatprep.subr.bf16.mxu0 %v1292
    %1747 = vmatpush1.bf16.msra.mxu0 %v1291
    %1748 = vmatprep.subr.bf16.mxu0 %v1284
    %1749 = vmatpush1.bf16.msra.mxu0 %v1283
    %1750 = vmatprep.subr.bf16.mxu0 %v1276
    %1751 = vmatpush1.bf16.msra.mxu0 %v1275
    %1752 = vmatprep.subr.bf16.mxu0 %v1268
    %1753 = vmatpush1.bf16.msra.mxu0 %v1267
    %1754 = vmatprep.subr.bf16.mxu0 %v1260
    %1755 = vmatpush1.bf16.msra.mxu0 %v1259
    %1756 = vmatprep.subr.bf16.mxu0 %v1252
    %1757 = vmatpush1.bf16.msra.mxu0 %v1251
    %1758 = vmatprep.subr.bf16.mxu0 %v1244
    %1759 = vmatpush1.bf16.msra.mxu0 %v1243
    %1760 = vmatprep.subr.bf16.mxu0 %v1236
    %1761 = vmatpush1.bf16.msra.mxu0 %v1235
    %1762 = vmatprep.subr.bf16.mxu0 %v1356
    %1763 = vmatpush2.bf16.msra.mxu0 %v1355
    %1764 = vmatprep.subr.bf16.mxu0 %v1348
    %1765 = vmatpush2.bf16.msra.mxu0 %v1347
    %1766 = vmatprep.subr.bf16.mxu0 %v1340
    %1767 = vmatpush2.bf16.msra.mxu0 %v1339
    %1768 = vmatprep.subr.bf16.mxu0 %v1332
    %1769 = vmatpush2.bf16.msra.mxu0 %v1331
    %1770 = vmatprep.subr.bf16.mxu0 %v1324
    %1771 = vmatpush2.bf16.msra.mxu0 %v1323
    %1772 = vmatprep.subr.bf16.mxu0 %v1316
    %1773 = vmatpush2.bf16.msra.mxu0 %v1315
    %1774 = vmatprep.subr.bf16.mxu0 %v1308
    %1775 = vmatpush2.bf16.msra.mxu0 %v1307
    %1776 = vmatprep.subr.bf16.mxu0 %v1300
    %1777 = vmatpush2.bf16.msra.mxu0 %v1299
    %1778 = vmatprep.mubr.bf16.mxu0 %v332
    %1779 = vmatmul.mubr.bf16.gmra.mxu0 %v331
    %v1780 = vpop.f32.mrf.mxu0
    %v1781 = vadd.f32 %v1738, %v1780
    %v1782 = vpop.f32.mrf.mxu0
    %v1783 = vadd.f32 %v1740, %v1782
    %v1784 = vpop.f32.mrf.mxu0
    %v1785 = vadd.f32 %v1742, %v1784
    %v1786 = vpop.f32.mrf.mxu0
    %v1787 = vadd.f32 %v1744, %v1786
    %1788 = vdwg.mxu0
    %1789 = vmatprep.subr.bf16.mxu0 %v1166
    %1790 = vmatpush1.bf16.msra.mxu0 %v1165
    %1791 = vmatprep.subr.bf16.mxu0 %v1158
    %1792 = vmatpush1.bf16.msra.mxu0 %v1157
    %1793 = vmatprep.subr.bf16.mxu0 %v1150
    %1794 = vmatpush1.bf16.msra.mxu0 %v1149
    %1795 = vmatprep.subr.bf16.mxu0 %v1142
    %1796 = vmatpush1.bf16.msra.mxu0 %v1141
    %1797 = vmatprep.subr.bf16.mxu0 %v1134
    %1798 = vmatpush1.bf16.msra.mxu0 %v1133
    %1799 = vmatprep.subr.bf16.mxu0 %v1126
    %1800 = vmatpush1.bf16.msra.mxu0 %v1125
    %1801 = vmatprep.subr.bf16.mxu0 %v1118
    %1802 = vmatpush1.bf16.msra.mxu0 %v1117
    %1803 = vmatprep.subr.bf16.mxu0 %v1110
    %1804 = vmatpush1.bf16.msra.mxu0 %v1109
    %1805 = vmatprep.subr.bf16.mxu0 %v1230
    %1806 = vmatpush2.bf16.msra.mxu0 %v1229
    %1807 = vmatprep.subr.bf16.mxu0 %v1222
    %1808 = vmatpush2.bf16.msra.mxu0 %v1221
    %1809 = vmatprep.subr.bf16.mxu0 %v1214
    %1810 = vmatpush2.bf16.msra.mxu0 %v1213
    %1811 = vmatprep.subr.bf16.mxu0 %v1206
    %1812 = vmatpush2.bf16.msra.mxu0 %v1205
    %1813 = vmatprep.subr.bf16.mxu0 %v1198
    %1814 = vmatpush2.bf16.msra.mxu0 %v1197
    %1815 = vmatprep.subr.bf16.mxu0 %v1190
    %1816 = vmatpush2.bf16.msra.mxu0 %v1189
    %1817 = vmatprep.subr.bf16.mxu0 %v1182
    %1818 = vmatpush2.bf16.msra.mxu0 %v1181
    %1819 = vmatprep.subr.bf16.mxu0 %v1174
    %1820 = vmatpush2.bf16.msra.mxu0 %v1173
    %1821 = vmatprep.mubr.bf16.mxu0 %v330
    %1822 = vmatmul.mubr.bf16.gmra.mxu0 %v329
    %v1823 = vpop.f32.mrf.mxu0
    %v1824 = vadd.f32 %v296, %v1823
    %v1825 = vpop.f32.mrf.mxu0
    %v1826 = vadd.f32 %v300, %v1825
    %v1827 = vpop.f32.mrf.mxu0
    %v1828 = vadd.f32 %v296, %v1827
    %v1829 = vpop.f32.mrf.mxu0
    %v1830 = vadd.f32 %v300, %v1829
    %1831 = vdwg.mxu0
    %1832 = vmatprep.subr.bf16.mxu0 %v1294
    %1833 = vmatpush1.bf16.msra.mxu0 %v1293
    %1834 = vmatprep.subr.bf16.mxu0 %v1286
    %1835 = vmatpush1.bf16.msra.mxu0 %v1285
    %1836 = vmatprep.subr.bf16.mxu0 %v1278
    %1837 = vmatpush1.bf16.msra.mxu0 %v1277
    %1838 = vmatprep.subr.bf16.mxu0 %v1270
    %1839 = vmatpush1.bf16.msra.mxu0 %v1269
    %1840 = vmatprep.subr.bf16.mxu0 %v1262
    %1841 = vmatpush1.bf16.msra.mxu0 %v1261
    %1842 = vmatprep.subr.bf16.mxu0 %v1254
    %1843 = vmatpush1.bf16.msra.mxu0 %v1253
    %1844 = vmatprep.subr.bf16.mxu0 %v1246
    %1845 = vmatpush1.bf16.msra.mxu0 %v1245
    %1846 = vmatprep.subr.bf16.mxu0 %v1238
    %1847 = vmatpush1.bf16.msra.mxu0 %v1237
    %1848 = vmatprep.subr.bf16.mxu0 %v1358
    %1849 = vmatpush2.bf16.msra.mxu0 %v1357
    %1850 = vmatprep.subr.bf16.mxu0 %v1350
    %1851 = vmatpush2.bf16.msra.mxu0 %v1349
    %1852 = vmatprep.subr.bf16.mxu0 %v1342
    %1853 = vmatpush2.bf16.msra.mxu0 %v1341
    %1854 = vmatprep.subr.bf16.mxu0 %v1334
    %1855 = vmatpush2.bf16.msra.mxu0 %v1333
    %1856 = vmatprep.subr.bf16.mxu0 %v1326
    %1857 = vmatpush2.bf16.msra.mxu0 %v1325
    %1858 = vmatprep.subr.bf16.mxu0 %v1318
    %1859 = vmatpush2.bf16.msra.mxu0 %v1317
    %1860 = vmatprep.subr.bf16.mxu0 %v1310
    %1861 = vmatpush2.bf16.msra.mxu0 %v1309
    %1862 = vmatprep.subr.bf16.mxu0 %v1302
    %1863 = vmatpush2.bf16.msra.mxu0 %v1301
    %1864 = vmatprep.mubr.bf16.mxu0 %v332
    %1865 = vmatmul.mubr.bf16.gmra.mxu0 %v331
    %v1866 = vpop.f32.mrf.mxu0
    %v1867 = vadd.f32 %v1824, %v1866
    %v1868 = vpop.f32.mrf.mxu0
    %v1869 = vadd.f32 %v1826, %v1868
    %v1870 = vpop.f32.mrf.mxu0
    %v1871 = vadd.f32 %v1828, %v1870
    %v1872 = vpop.f32.mrf.mxu0
    %v1873 = vadd.f32 %v1830, %v1872
    %1874 = vdwg.mxu0
    %1875 = vmatprep.subr.bf16.mxu0 %v1168
    %1876 = vmatpush1.bf16.msra.mxu0 %v1167
    %1877 = vmatprep.subr.bf16.mxu0 %v1160
    %1878 = vmatpush1.bf16.msra.mxu0 %v1159
    %1879 = vmatprep.subr.bf16.mxu0 %v1152
    %1880 = vmatpush1.bf16.msra.mxu0 %v1151
    %1881 = vmatprep.subr.bf16.mxu0 %v1144
    %1882 = vmatpush1.bf16.msra.mxu0 %v1143
    %1883 = vmatprep.subr.bf16.mxu0 %v1136
    %1884 = vmatpush1.bf16.msra.mxu0 %v1135
    %1885 = vmatprep.subr.bf16.mxu0 %v1128
    %1886 = vmatpush1.bf16.msra.mxu0 %v1127
    %1887 = vmatprep.subr.bf16.mxu0 %v1120
    %1888 = vmatpush1.bf16.msra.mxu0 %v1119
    %1889 = vmatprep.subr.bf16.mxu0 %v1112
    %1890 = vmatpush1.bf16.msra.mxu0 %v1111
    %1891 = vmatprep.subr.bf16.mxu0 %v1232
    %1892 = vmatpush2.bf16.msra.mxu0 %v1231
    %1893 = vmatprep.subr.bf16.mxu0 %v1224
    %1894 = vmatpush2.bf16.msra.mxu0 %v1223
    %1895 = vmatprep.subr.bf16.mxu0 %v1216
    %1896 = vmatpush2.bf16.msra.mxu0 %v1215
    %1897 = vmatprep.subr.bf16.mxu0 %v1208
    %1898 = vmatpush2.bf16.msra.mxu0 %v1207
    %1899 = vmatprep.subr.bf16.mxu0 %v1200
    %1900 = vmatpush2.bf16.msra.mxu0 %v1199
    %1901 = vmatprep.subr.bf16.mxu0 %v1192
    %1902 = vmatpush2.bf16.msra.mxu0 %v1191
    %1903 = vmatprep.subr.bf16.mxu0 %v1184
    %1904 = vmatpush2.bf16.msra.mxu0 %v1183
    %1905 = vmatprep.subr.bf16.mxu0 %v1176
    %1906 = vmatpush2.bf16.msra.mxu0 %v1175
    %1907 = vmatprep.mubr.bf16.mxu0 %v330
    %1908 = vmatmul.mubr.bf16.gmra.mxu0 %v329
    %v1909 = vpop.f32.mrf.mxu0
    %v1910 = vadd.f32 %v304, %v1909
    %v1911 = vpop.f32.mrf.mxu0
    %v1912 = vadd.f32 %v308, %v1911
    %v1913 = vpop.f32.mrf.mxu0
    %v1914 = vadd.f32 %v304, %v1913
    %v1915 = vpop.f32.mrf.mxu0
    %v1916 = vadd.f32 %v308, %v1915
    %1917 = vdwg.mxu0
    %1918 = vmatprep.subr.bf16.mxu0 %v1296
    %1919 = vmatpush1.bf16.msra.mxu0 %v1295
    %1920 = vmatprep.subr.bf16.mxu0 %v1288
    %1921 = vmatpush1.bf16.msra.mxu0 %v1287
    %1922 = vmatprep.subr.bf16.mxu0 %v1280
    %1923 = vmatpush1.bf16.msra.mxu0 %v1279
    %1924 = vmatprep.subr.bf16.mxu0 %v1272
    %1925 = vmatpush1.bf16.msra.mxu0 %v1271
    %1926 = vmatprep.subr.bf16.mxu0 %v1264
    %1927 = vmatpush1.bf16.msra.mxu0 %v1263
    %1928 = vmatprep.subr.bf16.mxu0 %v1256
    %1929 = vmatpush1.bf16.msra.mxu0 %v1255
    %1930 = vmatprep.subr.bf16.mxu0 %v1248
    %1931 = vmatpush1.bf16.msra.mxu0 %v1247
    %1932 = vmatprep.subr.bf16.mxu0 %v1240
    %1933 = vmatpush1.bf16.msra.mxu0 %v1239
    %1934 = vmatprep.subr.bf16.mxu0 %v1360
    %1935 = vmatpush2.bf16.msra.mxu0 %v1359
    %1936 = vmatprep.subr.bf16.mxu0 %v1352
    %1937 = vmatpush2.bf16.msra.mxu0 %v1351
    %1938 = vmatprep.subr.bf16.mxu0 %v1344
    %1939 = vmatpush2.bf16.msra.mxu0 %v1343
    %1940 = vmatprep.subr.bf16.mxu0 %v1336
    %1941 = vmatpush2.bf16.msra.mxu0 %v1335
    %1942 = vmatprep.subr.bf16.mxu0 %v1328
    %1943 = vmatpush2.bf16.msra.mxu0 %v1327
    %1944 = vmatprep.subr.bf16.mxu0 %v1320
    %1945 = vmatpush2.bf16.msra.mxu0 %v1319
    %1946 = vmatprep.subr.bf16.mxu0 %v1312
    %1947 = vmatpush2.bf16.msra.mxu0 %v1311
    %1948 = vmatprep.subr.bf16.mxu0 %v1304
    %1949 = vmatpush2.bf16.msra.mxu0 %v1303
    %1950 = vmatprep.mubr.bf16.mxu0 %v332
    %1951 = vmatmul.mubr.bf16.gmra.mxu0 %v331
    %v1952 = vpop.f32.mrf.mxu0
    %v1953 = vadd.f32 %v1910, %v1952
    %v1954 = vpop.f32.mrf.mxu0
    %v1955 = vadd.f32 %v1912, %v1954
    %v1956 = vpop.f32.mrf.mxu0
    %v1957 = vadd.f32 %v1914, %v1956
    %v1958 = vpop.f32.mrf.mxu0
    %v1959 = vadd.f32 %v1916, %v1958
    %1960 = vdwg.mxu0
    %1961 = vst [vmem:[#allocation2] sm:$0xff] %v1695
    %1962 = vst [vmem:[#allocation2 + $0x8] sm:$0xff] %v1697
    %1963 = vst [vmem:[#allocation2 + $0x10] sm:$0xff] %v1781
    %1964 = vst [vmem:[#allocation2 + $0x18] sm:$0xff] %v1783
    %1965 = vst [vmem:[#allocation2 + $0x20] sm:$0xff] %v1867
    %1966 = vst [vmem:[#allocation2 + $0x28] sm:$0xff] %v1869
    %1967 = vst [vmem:[#allocation2 + $0x30] sm:$0xff] %v1953
    %1968 = vst [vmem:[#allocation2 + $0x38] sm:$0xff] %v1955
    %1969 = vst [vmem:[#allocation2 + $0x40] sm:$0xff] %v1699
    %1970 = vst [vmem:[#allocation2 + $0x48] sm:$0xff] %v1701
    %1971 = vst [vmem:[#allocation2 + $0x50] sm:$0xff] %v1785
    %1972 = vst [vmem:[#allocation2 + $0x58] sm:$0xff] %v1787
    %1973 = vst [vmem:[#allocation2 + $0x60] sm:$0xff] %v1871
    %1974 = vst [vmem:[#allocation2 + $0x68] sm:$0xff] %v1873
    %1975 = vst [vmem:[#allocation2 + $0x70] sm:$0xff] %v1957
    %1976 = vst [vmem:[#allocation2 + $0x78] sm:$0xff] %v1959
    // Predicated region
    $region14: #{gcn_forward.1} parent=1 // pred_check
      _
    $region15: #{gcn_forward.1} parent=1 // pred_check_branch
      %1978 = sbr.rel (0) target = $region17
    $region16: #{gcn_forward.1} parent=1 // pred_region
      %s1980 = ssub.s32 2048, 2048
      %1981 = vsyncadd [#allocation3], %s1980
      %s1982 = sshll.u32 [#allocation2], 4
      %s1983 = int_to_ptr.vmem [resolvable:$true] %s1982
      %1988 = dma.vmem_to_hbm [thread:$0]  %s1983, 2048, %s3, [#allocation3], 1024, 1024, 64
    $region17: #{gcn_forward.1} parent=1 // pred_fallthru
      _
    // Predicated region
    $region18: #{gcn_forward.1} parent=1 // pred_check
      _
    $region19: #{gcn_forward.1} parent=1 // pred_check_branch
      %1990 = sbr.rel (0) target = $region21
    $region20: #{gcn_forward.1} parent=1 // pred_region
      %1991 = dma.done [#allocation3], 2048
    $region21: #{gcn_forward.1} parent=1 // pred_fallthru
      _
    %1992 = vsyncpa [#allocation3], 1

</llo_original>
